<compile_context>
chip_gen: v7x
topology: tpu7x:2x2x1
jax: 0.10.0
libtpu: 0.0.40
codegen_flags: <defaults>
</compile_context>

<pallas_src>
import jax
import jax.numpy as jnp
from jax.experimental import pallas as pl
from jax.experimental.pallas import tpu as pltpu

LANE = 128  # channel / class dims are zero-padded to one lane-dense width


# ----------------------------------------------------------------------------- kernel
def _extractor_kernel(x1_ref, x2_ref, x3_ref, w_ref, b_ref, out_ref):
    """Fused forward for one block of Bt images (grid axis = batch blocks).

    Each stage is a lane-dense (Bt*HW, K) @ (K, 128) MXU matmul in bf16 with f32
    accumulation, + bias + ReLU on the VPU in f32.  The stride-2 / stride-4
    downsamples arrive pre-applied to the INPUT (1x1 conv + ReLU commute with
    spatial subsampling exactly), so the coarse branches just rerun the cheap
    early stages.  GAP is a sublane-axis mean (XLU).  Everything stays in
    VMEM / vregs; one lane-dense (4, Bt, 128) slab is written per step.
    """
    f32, bf16 = jnp.float32, jnp.bfloat16
    Bt, HW1, c_in = x1_ref.shape
    HW2, HW3 = x2_ref.shape[1], x3_ref.shape[1]

    w1 = w_ref[0][:c_in, :]                       # (c_in, 128) bf16
    w2, w3, fcw = w_ref[1], w_ref[2], w_ref[3]    # (128, 128) bf16 each
    biases = b_ref[...]                           # (4, 128) f32
    b1, b2, b3, fcb = biases[0:1], biases[1:2], biases[2:3], biases[3:4]

    def conv_relu(x2d, w, b):
        y = jnp.dot(x2d, w, preferred_element_type=f32) + b
        return jnp.maximum(y, 0.0)                # f32 elementwise (v5e-safe)

    def gap(h2d, hw):
        return jnp.mean(h2d.reshape(Bt, hw, LANE), axis=1)   # (Bt, 128) f32, XLU

    # Full-resolution branch: stage 1 (pooled feature 1).
    h1 = conv_relu(x1_ref[...].reshape(Bt * HW1, c_in), w1, b1)
    out_ref[0] = gap(h1, HW1)

    # Half-resolution branch: stages 1-2 (pooled feature 2).
    a = conv_relu(x2_ref[...].reshape(Bt * HW2, c_in), w1, b1)
    h2 = conv_relu(a.astype(bf16), w2, b2)
    out_ref[1] = gap(h2, HW2)

    # Quarter-resolution branch: stages 1-3 (pooled feature 3 + fc head).
    a = conv_relu(x3_ref[...].reshape(Bt * HW3, c_in), w1, b1)
    a = conv_relu(a.astype(bf16), w2, b2)
    h3 = conv_relu(a.astype(bf16), w3, b3)
    p3 = gap(h3, HW3)
    out_ref[2] = p3

    # fc head for the whole batch block: one (Bt, 128) @ (128, 128) dot.
    out_ref[3] = jnp.dot(p3.astype(bf16), fcw, preferred_element_type=f32) + fcb


# ----------------------------------------------------------------------------- helpers
def _pad2(w, rows, cols):
    return jnp.pad(w, ((0, rows - w.shape[0]), (0, cols - w.shape[1])))


def _pick_batch_tile(B, HW1):
    """One grid step handles Bt images stacked along the MXU M dimension.

    Bt must be either the whole batch (block == full array dim) or a multiple
    of 8 (full sublanes for the merged (4, Bt, 128) output slab).  The per-step
    f32 activation slab (~Bt * HW1 * 128 * 4 B) is capped at ~8 MiB so the
    kernel stays VMEM-resident even on v7x's 64 MiB.
    """
    cap = max(1, (8 * 1024 * 1024) // (HW1 * LANE * 4))
    for bt in (32, 16, 8):
        if bt <= cap and B % bt == 0:
            return bt
    return B


def init_params(key, c_in=4, stage_channels=(8, 16, 32), num_classes=10):
    """Synthetic 1x1-conv backbone weights, padded to (LANE, LANE), stacked into
    ONE bf16 weight slab and ONE f32 bias slab (hoisted out of the per-call
    path).  Stand-in for the torchvision feature-extractor graph surgery."""
    assert len(stage_channels) == 3
    keys = jax.random.split(key, 2 * len(stage_channels) + 2)
    ws, bs = [], []
    c = c_in
    ki = 0
    for c_out in stage_channels:
        w = 0.1 * jax.random.normal(keys[ki], (c, c_out), dtype=jnp.float32)
        b = 0.01 * jax.random.normal(keys[ki + 1], (c_out,), dtype=jnp.float32)
        ws.append(_pad2(w, LANE, LANE))
        bs.append(jnp.pad(b, (0, LANE - c_out)))
        ki += 2
        c = c_out
    fcw = 0.1 * jax.random.normal(keys[ki], (c, num_classes), dtype=jnp.float32)
    fcb = 0.01 * jax.random.normal(keys[ki + 1], (num_classes,), dtype=jnp.float32)
    ws.append(_pad2(fcw, LANE, LANE))
    bs.append(jnp.pad(fcb, (0, LANE - num_classes)))
    return {
        "w_stack": jnp.stack(ws).astype(jnp.bfloat16),   # (4, LANE, LANE) bf16
        "b_stack": jnp.stack(bs).astype(jnp.float32),    # (4, LANE)       f32
        "stage_channels": tuple(stage_channels),
        "num_classes": num_classes,
        "c_in": c_in,
    }


# ----------------------------------------------------------------------------- forward
def _fused_forward(x_nchw, params):
    B, c_in, H, W = x_nchw.shape
    assert H % 4 == 0 and W % 4 == 0, "synthetic backbone needs H, W divisible by 4"
    HW1, HW2, HW3 = H * W, (H // 2) * (W // 2), (H // 4) * (W // 4)

    # NCHW -> channels-last ONCE; bf16 halves the only per-step HBM read and is
    # the MXU-native operand dtype.  The strided views replace the old O(HW^2)
    # selection matrices (1x1 conv + ReLU commute with the subsampling exactly).
    xb = jnp.transpose(x_nchw, (0, 2, 3, 1)).astype(jnp.bfloat16)     # (B,H,W,C)
    x1 = xb.reshape(B, HW1, c_in)
    x2 = xb[:, ::2, ::2, :].reshape(B, HW2, c_in)
    x3 = xb[:, ::4, ::4, :].reshape(B, HW3, c_in)

    Bt = _pick_batch_tile(B, HW1)
    grid = (B // Bt,)

    out = pl.pallas_call(
        _extractor_kernel,
        out_shape=jax.ShapeDtypeStruct((4, B, LANE), jnp.float32),
        grid=grid,
        in_specs=[
            pl.BlockSpec((Bt, HW1, c_in), lambda i: (i, 0, 0)),   # x, full res
            pl.BlockSpec((Bt, HW2, c_in), lambda i: (i, 0, 0)),   # x, /2
            pl.BlockSpec((Bt, HW3, c_in), lambda i: (i, 0, 0)),   # x, /4
            pl.BlockSpec((4, LANE, LANE), lambda i: (0, 0, 0)),   # w1|w2|w3|fcw
            pl.BlockSpec((4, LANE), lambda i: (0, 0)),            # b1|b2|b3|fcb
        ],
        out_specs=pl.BlockSpec((4, Bt, LANE), lambda i: (0, i, 0)),
        compiler_params=pltpu.CompilerParams(
            # Independent batch blocks; on v7x pltpu.CORE_PARALLEL on this axis
            # is the next thing to try once the blocked grid length is >= 2.
            dimension_semantics=("parallel",),
        ),
    )(x1, x2, x3, params["w_stack"], params["b_stack"])

    return out   # (4, B, LANE): rows = pooled1, pooled2, pooled3, logits


def extractor_forward(x_nchw, params, classify_only=True):
    """Mirrors Extractor.forward: fc logits if classify_only, else the
    `self.pool` branch: pooled intermediate features + fc logits."""
    out = _fused_forward(x_nchw, params)
    c1, c2, c3 = params["stage_channels"]
    logits = out[3, :, : params["num_classes"]]
    if classify_only:
        return logits
    return [out[0, :, :c1], out[1, :, :c2], out[2, :, :c3], logits]


# ----------------------------------------------------------------------------- reference
def _reference_forward(x_nchw, params):
    """Pure-JAX reference using the same bf16 dot operands / f32 accumulation,
    with the original downsample-after-stage ordering (mathematically identical
    to the kernel's downsample-the-input ordering for pointwise 1x1 stages)."""
    f32 = jnp.float32
    B, c_in, H, W = x_nchw.shape
    cs = [c_in] + list(params["stage_channels"])
    ws, bs = params["w_stack"], params["b_stack"]
    h = jnp.transpose(x_nchw, (0, 2, 3, 1)).astype(jnp.bfloat16)      # (B,H,W,C)
    pooled = []
    for i in range(3):
        if i > 0:
            h = h[:, ::2, ::2, :]
        w = ws[i][: cs[i], : cs[i + 1]]
        b = bs[i][: cs[i + 1]]
        hf = jnp.maximum(
            jnp.einsum("bhwc,cd->bhwd", h, w, preferred_element_type=f32) + b, 0.0)
        pooled.append(hf.mean(axis=(1, 2)))
        h = hf.astype(jnp.bfloat16)
    fcw = ws[3][: cs[-1], : params["num_classes"]]
    fcb = bs[3][: params["num_classes"]]
    logits = jnp.dot(pooled[-1].astype(jnp.bfloat16), fcw,
                     preferred_element_type=f32) + fcb
    return pooled, logits


# ----------------------------------------------------------------------------- main
if __name__ == "__main__":
    key = jax.random.PRNGKey(0)
    k_x, k_p = jax.random.split(key)

    B, C_in, H, W = 2, 4, 16, 16
    x = jax.random.normal(k_x, (B, C_in, H, W), dtype=jnp.float32)
    params = init_params(k_p, c_in=C_in, stage_channels=(8, 16, 32), num_classes=10)

    # classify_only=True path: only the final fc output.
    logits = extractor_forward(x, params, classify_only=True)
    logits = jax.block_until_ready(logits)
    assert logits.shape == (B, 10)

    # classify_only=False path: pooled intermediate features + fc output.
    outs = extractor_forward(x, params, classify_only=False)
    outs = jax.block_until_ready(outs)
    assert outs[0].shape == (B, 8)
    assert outs[1].shape == (B, 16)
    assert outs[2].shape == (B, 32)
    assert outs[-1].shape == (B, 10)

    # numerical check against a pure-JAX reference (same bf16 operand precision)
    ref_pooled, ref_logits = _reference_forward(x, params)
    assert jnp.allclose(logits, ref_logits, rtol=1e-2, atol=1e-3), "logits mismatch"
    for got, ref in zip(outs[:-1], ref_pooled):
        assert jnp.allclose(got, ref, rtol=1e-2, atol=1e-3), "pooled feature mismatch"

    print("KERNEL_OK")
</pallas_src>

<mosaic_0001>
module attributes {stable_mosaic.version = 11 : i64} {
  func.func @_extractor_kernel(%arg0: i32, %arg1: memref<2x256x4xbf16, #tpu.memory_space<vmem>>, %arg2: memref<2x64x4xbf16, #tpu.memory_space<vmem>>, %arg3: memref<2x16x4xbf16, #tpu.memory_space<vmem>>, %arg4: memref<4x128x128xbf16, #tpu.memory_space<vmem>>, %arg5: memref<4x128xf32, #tpu.memory_space<vmem>>, %arg6: memref<4x2x128xf32, #tpu.memory_space<vmem>>) attributes {dimension_semantics = [#tpu.dimension_semantics<parallel>], iteration_bounds = array<i64: 1>, scalar_prefetch = 0 : i64, scratch_operands = 0 : i64, tpu.core_type = #tpu.core_type<tc>, window_params = [{transform_indices = @transform_0, window_bounds = array<i64: 2, 256, 4>}, {transform_indices = @transform_1, window_bounds = array<i64: 2, 64, 4>}, {transform_indices = @transform_2, window_bounds = array<i64: 2, 16, 4>}, {pipeline_mode = #tpu.pipeline_mode<synchronous>, transform_indices = @transform_3, window_bounds = array<i64: 4, 128, 128>}, {pipeline_mode = #tpu.pipeline_mode<synchronous>, transform_indices = @transform_4, window_bounds = array<i64: 4, 128>}, {transform_indices = @transform_5, window_bounds = array<i64: 4, 2, 128>}]} {
    %c0 = arith.constant 0 : index
    %c0_0 = arith.constant 0 : index
    %c0_1 = arith.constant 0 : index
    %0 = vector.load %arg4[%c0, %c0_0, %c0_1] : memref<4x128x128xbf16, #tpu.memory_space<vmem>>, vector<1x128x128xbf16>
    %1 = vector.shape_cast %0 : vector<1x128x128xbf16> to vector<128x128xbf16>
    %2 = vector.extract_strided_slice %1 {offsets = [0, 0], sizes = [4, 128], strides = [1, 1]} : vector<128x128xbf16> to vector<4x128xbf16>
    %c1 = arith.constant 1 : index
    %c0_2 = arith.constant 0 : index
    %c0_3 = arith.constant 0 : index
    %3 = vector.load %arg4[%c1, %c0_2, %c0_3] : memref<4x128x128xbf16, #tpu.memory_space<vmem>>, vector<1x128x128xbf16>
    %4 = vector.shape_cast %3 : vector<1x128x128xbf16> to vector<128x128xbf16>
    %c2 = arith.constant 2 : index
    %c0_4 = arith.constant 0 : index
    %c0_5 = arith.constant 0 : index
    %5 = vector.load %arg4[%c2, %c0_4, %c0_5] : memref<4x128x128xbf16, #tpu.memory_space<vmem>>, vector<1x128x128xbf16>
    %6 = vector.shape_cast %5 : vector<1x128x128xbf16> to vector<128x128xbf16>
    %c3 = arith.constant 3 : index
    %c0_6 = arith.constant 0 : index
    %c0_7 = arith.constant 0 : index
    %7 = vector.load %arg4[%c3, %c0_6, %c0_7] : memref<4x128x128xbf16, #tpu.memory_space<vmem>>, vector<1x128x128xbf16>
    %8 = vector.shape_cast %7 : vector<1x128x128xbf16> to vector<128x128xbf16>
    %c0_8 = arith.constant 0 : index
    %c0_9 = arith.constant 0 : index
    %9 = vector.load %arg5[%c0_8, %c0_9] : memref<4x128xf32, #tpu.memory_space<vmem>>, vector<4x128xf32>
    %10 = vector.extract_strided_slice %9 {offsets = [0, 0], sizes = [1, 128], strides = [1, 1]} : vector<4x128xf32> to vector<1x128xf32>
    %11 = vector.extract_strided_slice %9 {offsets = [1, 0], sizes = [1, 128], strides = [1, 1]} : vector<4x128xf32> to vector<1x128xf32>
    %12 = vector.extract_strided_slice %9 {offsets = [2, 0], sizes = [1, 128], strides = [1, 1]} : vector<4x128xf32> to vector<1x128xf32>
    %13 = vector.extract_strided_slice %9 {offsets = [3, 0], sizes = [1, 128], strides = [1, 1]} : vector<4x128xf32> to vector<1x128xf32>
    %c0_10 = arith.constant 0 : index
    %c0_11 = arith.constant 0 : index
    %c0_12 = arith.constant 0 : index
    %14 = vector.load %arg1[%c0_10, %c0_11, %c0_12] : memref<2x256x4xbf16, #tpu.memory_space<vmem>>, vector<2x256x4xbf16>
    %15 = vector.shape_cast %14 : vector<2x256x4xbf16> to vector<512x4xbf16>
    %cst = arith.constant dense<0.000000e+00> : vector<512x128xf32>
    %16 = tpu.matmul %15, %2, %cst {dimension_numbers = #tpu.dot_dimension_numbers<[1], [0], [0], [1], [0, 0, 1, 1], [], []>} : vector<512x4xbf16>, vector<4x128xbf16>, vector<512x128xf32> -> vector<512x128xf32>
    %17 = vector.broadcast %10 : vector<1x128xf32> to vector<512x128xf32>
    %18 = arith.addf %16, %17 : vector<512x128xf32>
    %cst_13 = arith.constant 0.000000e+00 : f32
    %19 = vector.broadcast %cst_13 : f32 to vector<512x128xf32>
    %20 = arith.maximumf %18, %19 : vector<512x128xf32>
    %21 = vector.shape_cast %20 : vector<512x128xf32> to vector<2x256x128xf32>
    %cst_14 = arith.constant dense<0.000000e+00> : vector<2x128xf32>
    %22 = vector.multi_reduction <add>, %21, %cst_14 [1] : vector<2x256x128xf32> to vector<2x128xf32>
    %cst_15 = arith.constant 2.560000e+02 : f32
    %23 = vector.broadcast %cst_15 : f32 to vector<2x128xf32>
    %24 = arith.divf %22, %23 : vector<2x128xf32>
    %c0_16 = arith.constant 0 : index
    %c0_17 = arith.constant 0 : index
    %c0_18 = arith.constant 0 : index
    %25 = vector.load %arg6[%c0_16, %c0_17, %c0_18] : memref<4x2x128xf32, #tpu.memory_space<vmem>>, vector<1x2x128xf32>
    %26 = vector.shape_cast %25 : vector<1x2x128xf32> to vector<2x128xf32>
    %27 = vector.shape_cast %24 : vector<2x128xf32> to vector<1x2x128xf32>
    tpu.vector_store %arg6[%c0_16, %c0_17, %c0_18], %27 {strides = array<i32>} : memref<4x2x128xf32, #tpu.memory_space<vmem>>, vector<1x2x128xf32>,
    %c0_19 = arith.constant 0 : index
    %c0_20 = arith.constant 0 : index
    %c0_21 = arith.constant 0 : index
    %28 = vector.load %arg2[%c0_19, %c0_20, %c0_21] : memref<2x64x4xbf16, #tpu.memory_space<vmem>>, vector<2x64x4xbf16>
    %29 = vector.shape_cast %28 : vector<2x64x4xbf16> to vector<128x4xbf16>
    %cst_22 = arith.constant dense<0.000000e+00> : vector<128x128xf32>
    %30 = tpu.matmul %29, %2, %cst_22 {dimension_numbers = #tpu.dot_dimension_numbers<[1], [0], [0], [1], [0, 0, 1, 1], [], []>} : vector<128x4xbf16>, vector<4x128xbf16>, vector<128x128xf32> -> vector<128x128xf32>
    %31 = vector.broadcast %10 : vector<1x128xf32> to vector<128x128xf32>
    %32 = arith.addf %30, %31 : vector<128x128xf32>
    %cst_23 = arith.constant 0.000000e+00 : f32
    %33 = vector.broadcast %cst_23 : f32 to vector<128x128xf32>
    %34 = arith.maximumf %32, %33 : vector<128x128xf32>
    %35 = arith.truncf %34 : vector<128x128xf32> to vector<128x128xbf16>
    %cst_24 = arith.constant dense<0.000000e+00> : vector<128x128xf32>
    %36 = tpu.matmul %35, %4, %cst_24 {dimension_numbers = #tpu.dot_dimension_numbers<[1], [0], [0], [1], [0, 0, 1, 1], [], []>} : vector<128x128xbf16>, vector<128x128xbf16>, vector<128x128xf32> -> vector<128x128xf32>
    %37 = vector.broadcast %11 : vector<1x128xf32> to vector<128x128xf32>
    %38 = arith.addf %36, %37 : vector<128x128xf32>
    %cst_25 = arith.constant 0.000000e+00 : f32
    %39 = vector.broadcast %cst_25 : f32 to vector<128x128xf32>
    %40 = arith.maximumf %38, %39 : vector<128x128xf32>
    %41 = vector.shape_cast %40 : vector<128x128xf32> to vector<2x64x128xf32>
    %cst_26 = arith.constant dense<0.000000e+00> : vector<2x128xf32>
    %42 = vector.multi_reduction <add>, %41, %cst_26 [1] : vector<2x64x128xf32> to vector<2x128xf32>
    %cst_27 = arith.constant 6.400000e+01 : f32
    %43 = vector.broadcast %cst_27 : f32 to vector<2x128xf32>
    %44 = arith.divf %42, %43 : vector<2x128xf32>
    %c1_28 = arith.constant 1 : index
    %c0_29 = arith.constant 0 : index
    %c0_30 = arith.constant 0 : index
    %45 = vector.load %arg6[%c1_28, %c0_29, %c0_30] : memref<4x2x128xf32, #tpu.memory_space<vmem>>, vector<1x2x128xf32>
    %46 = vector.shape_cast %45 : vector<1x2x128xf32> to vector<2x128xf32>
    %47 = vector.shape_cast %44 : vector<2x128xf32> to vector<1x2x128xf32>
    tpu.vector_store %arg6[%c1_28, %c0_29, %c0_30], %47 {strides = array<i32>} : memref<4x2x128xf32, #tpu.memory_space<vmem>>, vector<1x2x128xf32>,
    %c0_31 = arith.constant 0 : index
    %c0_32 = arith.constant 0 : index
    %c0_33 = arith.constant 0 : index
    %48 = vector.load %arg3[%c0_31, %c0_32, %c0_33] : memref<2x16x4xbf16, #tpu.memory_space<vmem>>, vector<2x16x4xbf16>
    %49 = vector.shape_cast %48 : vector<2x16x4xbf16> to vector<32x4xbf16>
    %cst_34 = arith.constant dense<0.000000e+00> : vector<32x128xf32>
    %50 = tpu.matmul %49, %2, %cst_34 {dimension_numbers = #tpu.dot_dimension_numbers<[1], [0], [0], [1], [0, 0, 1, 1], [], []>} : vector<32x4xbf16>, vector<4x128xbf16>, vector<32x128xf32> -> vector<32x128xf32>
    %51 = vector.broadcast %10 : vector<1x128xf32> to vector<32x128xf32>
    %52 = arith.addf %50, %51 : vector<32x128xf32>
    %cst_35 = arith.constant 0.000000e+00 : f32
    %53 = vector.broadcast %cst_35 : f32 to vector<32x128xf32>
    %54 = arith.maximumf %52, %53 : vector<32x128xf32>
    %55 = arith.truncf %54 : vector<32x128xf32> to vector<32x128xbf16>
    %cst_36 = arith.constant dense<0.000000e+00> : vector<32x128xf32>
    %56 = tpu.matmul %55, %4, %cst_36 {dimension_numbers = #tpu.dot_dimension_numbers<[1], [0], [0], [1], [0, 0, 1, 1], [], []>} : vector<32x128xbf16>, vector<128x128xbf16>, vector<32x128xf32> -> vector<32x128xf32>
    %57 = vector.broadcast %11 : vector<1x128xf32> to vector<32x128xf32>
    %58 = arith.addf %56, %57 : vector<32x128xf32>
    %cst_37 = arith.constant 0.000000e+00 : f32
    %59 = vector.broadcast %cst_37 : f32 to vector<32x128xf32>
    %60 = arith.maximumf %58, %59 : vector<32x128xf32>
    %61 = arith.truncf %60 : vector<32x128xf32> to vector<32x128xbf16>
    %cst_38 = arith.constant dense<0.000000e+00> : vector<32x128xf32>
    %62 = tpu.matmul %61, %6, %cst_38 {dimension_numbers = #tpu.dot_dimension_numbers<[1], [0], [0], [1], [0, 0, 1, 1], [], []>} : vector<32x128xbf16>, vector<128x128xbf16>, vector<32x128xf32> -> vector<32x128xf32>
    %63 = vector.broadcast %12 : vector<1x128xf32> to vector<32x128xf32>
    %64 = arith.addf %62, %63 : vector<32x128xf32>
    %cst_39 = arith.constant 0.000000e+00 : f32
    %65 = vector.broadcast %cst_39 : f32 to vector<32x128xf32>
    %66 = arith.maximumf %64, %65 : vector<32x128xf32>
    %67 = vector.shape_cast %66 : vector<32x128xf32> to vector<2x16x128xf32>
    %cst_40 = arith.constant dense<0.000000e+00> : vector<2x128xf32>
    %68 = vector.multi_reduction <add>, %67, %cst_40 [1] : vector<2x16x128xf32> to vector<2x128xf32>
    %cst_41 = arith.constant 1.600000e+01 : f32
    %69 = vector.broadcast %cst_41 : f32 to vector<2x128xf32>
    %70 = arith.divf %68, %69 : vector<2x128xf32>
    %c2_42 = arith.constant 2 : index
    %c0_43 = arith.constant 0 : index
    %c0_44 = arith.constant 0 : index
    %71 = vector.load %arg6[%c2_42, %c0_43, %c0_44] : memref<4x2x128xf32, #tpu.memory_space<vmem>>, vector<1x2x128xf32>
    %72 = vector.shape_cast %71 : vector<1x2x128xf32> to vector<2x128xf32>
    %73 = vector.shape_cast %70 : vector<2x128xf32> to vector<1x2x128xf32>
    tpu.vector_store %arg6[%c2_42, %c0_43, %c0_44], %73 {strides = array<i32>} : memref<4x2x128xf32, #tpu.memory_space<vmem>>, vector<1x2x128xf32>,
    %74 = arith.truncf %70 : vector<2x128xf32> to vector<2x128xbf16>
    %cst_45 = arith.constant dense<0.000000e+00> : vector<2x128xf32>
    %75 = tpu.matmul %74, %8, %cst_45 {dimension_numbers = #tpu.dot_dimension_numbers<[1], [0], [0], [1], [0, 0, 1, 1], [], []>} : vector<2x128xbf16>, vector<128x128xbf16>, vector<2x128xf32> -> vector<2x128xf32>
    %76 = vector.broadcast %13 : vector<1x128xf32> to vector<2x128xf32>
    %77 = arith.addf %75, %76 : vector<2x128xf32>
    %c3_46 = arith.constant 3 : index
    %c0_47 = arith.constant 0 : index
    %c0_48 = arith.constant 0 : index
    %78 = vector.load %arg6[%c3_46, %c0_47, %c0_48] : memref<4x2x128xf32, #tpu.memory_space<vmem>>, vector<1x2x128xf32>
    %79 = vector.shape_cast %78 : vector<1x2x128xf32> to vector<2x128xf32>
    %80 = vector.shape_cast %77 : vector<2x128xf32> to vector<1x2x128xf32>
    tpu.vector_store %arg6[%c3_46, %c0_47, %c0_48], %80 {strides = array<i32>} : memref<4x2x128xf32, #tpu.memory_space<vmem>>, vector<1x2x128xf32>,
    return
  }
  func.func @transform_0(%arg0: i32) -> (i32, i32, i32) {
    %c0_i32 = arith.constant 0 : i32
    %c0_i32_0 = arith.constant 0 : i32
    %c0_i32_1 = arith.constant 0 : i32
    return %arg0, %c0_i32, %c0_i32_0 : i32, i32, i32
  }
  func.func @transform_1(%arg0: i32) -> (i32, i32, i32) {
    %c0_i32 = arith.constant 0 : i32
    %c0_i32_0 = arith.constant 0 : i32
    %c0_i32_1 = arith.constant 0 : i32
    return %arg0, %c0_i32, %c0_i32_0 : i32, i32, i32
  }
  func.func @transform_2(%arg0: i32) -> (i32, i32, i32) {
    %c0_i32 = arith.constant 0 : i32
    %c0_i32_0 = arith.constant 0 : i32
    %c0_i32_1 = arith.constant 0 : i32
    return %arg0, %c0_i32, %c0_i32_0 : i32, i32, i32
  }
  func.func @transform_3(%arg0: i32) -> (i32, i32, i32) {
    %c0_i32 = arith.constant 0 : i32
    %c0_i32_0 = arith.constant 0 : i32
    %c0_i32_1 = arith.constant 0 : i32
    %c0_i32_2 = arith.constant 0 : i32
    return %c0_i32, %c0_i32_0, %c0_i32_1 : i32, i32, i32
  }
  func.func @transform_4(%arg0: i32) -> (i32, i32) {
    %c0_i32 = arith.constant 0 : i32
    %c0_i32_0 = arith.constant 0 : i32
    %c0_i32_1 = arith.constant 0 : i32
    return %c0_i32, %c0_i32_0 : i32, i32
  }
  func.func @transform_5(%arg0: i32) -> (i32, i32, i32) {
    %c0_i32 = arith.constant 0 : i32
    %c0_i32_0 = arith.constant 0 : i32
    %c0_i32_1 = arith.constant 0 : i32
    return %c0_i32, %arg0, %c0_i32_0 : i32, i32, i32
  }
}

</mosaic_0001>

<llo_original>
// kernel: tpu_custom_call.1
$region0: #{tpu_custom_call.1}
  #allocation0 [shape = 'u32[]', space=smem, size = 0x4, offset = 0x4, fixed_abs, tag = 'smem constant byte address 0x4 - core index']
  #allocation1 [shape = 'u32[144,128]{1,0:T(1,128)}', space=vmem, size = 0x12000, scoped, tag = 'internal scratch']
  %s0 = inlined_call_operand.vmem [shape: bf16[2,256,4], index: 0, kind: input, shape index: {}]
  %s1 = inlined_call_operand.vmem [shape: bf16[2,64,4], index: 1, kind: input, shape index: {}]
  %s2 = inlined_call_operand.vmem [shape: bf16[2,16,4], index: 2, kind: input, shape index: {}]
  %s3 = inlined_call_operand.vmem [shape: bf16[4,128,128], index: 3, kind: input, shape index: {}]
  %s4 = inlined_call_operand.vmem [shape: f32[4,128], index: 4, kind: input, shape index: {}]
  %s5 = inlined_call_operand.hbm [shape: f32[4,2,128], index: 5, kind: output, shape index: {}]
  %s6 = sld [smem:[#allocation0]]
  $region30: #{tpu_custom_call.1} parent=0
    _
  %s8 = ssub.s32 1, %s6
  %s9 = scalar_select 0, %s8, %s6
  $region1: #{tpu_custom_call.1} parent=0
    #allocation2 [shape = 'u8[4096]{0}', space=vmem, size = 0x1000, scoped, tag = 'output window, operand 0, single buffered']
    #allocation3 [shape = 's32[1]{0}', space=sflag, size = 0x4, scoped, tag = 'scoped memory for tpu_custom_call.1']
    %10 = vsyncpa [#allocation3], 0
    // Predicated region
    $region2: #{tpu_custom_call.1} parent=1 // pred_check
      _
    $region3: #{tpu_custom_call.1} parent=1 // pred_check_branch
      %12 = sbr.rel (0) target = $region5
    $region4: #{tpu_custom_call.1} parent=1 // pred_region
      _
    $region5: #{tpu_custom_call.1} parent=1 // pred_fallthru
      _
    // Predicated region
    $region6: #{tpu_custom_call.1} parent=1 // pred_check
      _
    $region7: #{tpu_custom_call.1} parent=1 // pred_check_branch
      %14 = sbr.rel (0) target = $region9
    $region8: #{tpu_custom_call.1} parent=1 // pred_region
      _
    $region9: #{tpu_custom_call.1} parent=1 // pred_fallthru
      _
    // Predicated region
    $region10: #{tpu_custom_call.1} parent=1 // pred_check
      _
    $region11: #{tpu_custom_call.1} parent=1 // pred_check_branch
      %16 = sbr.rel (0) target = $region13
    $region12: #{tpu_custom_call.1} parent=1 // pred_region
      _
    $region13: #{tpu_custom_call.1} parent=1 // pred_fallthru
      _
    // Predicated region
    $region14: #{tpu_custom_call.1} parent=1 // pred_check
      _
    $region15: #{tpu_custom_call.1} parent=1 // pred_check_branch
      %18 = sbr.rel (0) target = $region17
    $region16: #{tpu_custom_call.1} parent=1 // pred_region
      _
    $region17: #{tpu_custom_call.1} parent=1 // pred_fallthru
      _
    // Predicated region
    $region18: #{tpu_custom_call.1} parent=1 // pred_check
      _
    $region19: #{tpu_custom_call.1} parent=1 // pred_check_branch
      %20 = sbr.rel (0) target = $region21
    $region20: #{tpu_custom_call.1} parent=1 // pred_region
      _
    $region21: #{tpu_custom_call.1} parent=1 // pred_fallthru
      _
    %v22 = vld [vmem:[%s3] sm:$0xf]
    %s23 = scalar_lea.vmem %s3, 64
    %v24 = vld [vmem:[%s23] sm:$0xf]
    %v25 = vld [vmem:[%s23 + $0x4] sm:$0xf]
    %v26 = vld [vmem:[%s23 + $0x8] sm:$0xf]
    %v27 = vld [vmem:[%s23 + $0xc] sm:$0xf]
    %v28 = vld [vmem:[%s23 + $0x10] sm:$0xf]
    %v29 = vld [vmem:[%s23 + $0x14] sm:$0xf]
    %v30 = vld [vmem:[%s23 + $0x18] sm:$0xf]
    %v31 = vld [vmem:[%s23 + $0x1c] sm:$0xf]
    %v32 = vld [vmem:[%s23 + $0x20] sm:$0xf]
    %v33 = vld [vmem:[%s23 + $0x24] sm:$0xf]
    %v34 = vld [vmem:[%s23 + $0x28] sm:$0xf]
    %v35 = vld [vmem:[%s23 + $0x2c] sm:$0xf]
    %v36 = vld [vmem:[%s23 + $0x30] sm:$0xf]
    %v37 = vld [vmem:[%s23 + $0x34] sm:$0xf]
    %v38 = vld [vmem:[%s23 + $0x38] sm:$0xf]
    %v39 = vld [vmem:[%s23 + $0x3c] sm:$0xf]
    %s40 = scalar_lea.vmem %s3, 128
    %v41 = vld [vmem:[%s40] sm:$0xf]
    %v42 = vld [vmem:[%s40 + $0x4] sm:$0xf]
    %v43 = vld [vmem:[%s40 + $0x8] sm:$0xf]
    %v44 = vld [vmem:[%s40 + $0xc] sm:$0xf]
    %v45 = vld [vmem:[%s40 + $0x10] sm:$0xf]
    %v46 = vld [vmem:[%s40 + $0x14] sm:$0xf]
    %v47 = vld [vmem:[%s40 + $0x18] sm:$0xf]
    %v48 = vld [vmem:[%s40 + $0x1c] sm:$0xf]
    %v49 = vld [vmem:[%s40 + $0x20] sm:$0xf]
    %v50 = vld [vmem:[%s40 + $0x24] sm:$0xf]
    %v51 = vld [vmem:[%s40 + $0x28] sm:$0xf]
    %v52 = vld [vmem:[%s40 + $0x2c] sm:$0xf]
    %v53 = vld [vmem:[%s40 + $0x30] sm:$0xf]
    %v54 = vld [vmem:[%s40 + $0x34] sm:$0xf]
    %v55 = vld [vmem:[%s40 + $0x38] sm:$0xf]
    %v56 = vld [vmem:[%s40 + $0x3c] sm:$0xf]
    %s57 = scalar_lea.vmem %s3, 192
    %v58 = vld [vmem:[%s57] sm:$0xf]
    %v59 = vld [vmem:[%s57 + $0x4] sm:$0xf]
    %v60 = vld [vmem:[%s57 + $0x8] sm:$0xf]
    %v61 = vld [vmem:[%s57 + $0xc] sm:$0xf]
    %v62 = vld [vmem:[%s57 + $0x10] sm:$0xf]
    %v63 = vld [vmem:[%s57 + $0x14] sm:$0xf]
    %v64 = vld [vmem:[%s57 + $0x18] sm:$0xf]
    %v65 = vld [vmem:[%s57 + $0x1c] sm:$0xf]
    %v66 = vld [vmem:[%s57 + $0x20] sm:$0xf]
    %v67 = vld [vmem:[%s57 + $0x24] sm:$0xf]
    %v68 = vld [vmem:[%s57 + $0x28] sm:$0xf]
    %v69 = vld [vmem:[%s57 + $0x2c] sm:$0xf]
    %v70 = vld [vmem:[%s57 + $0x30] sm:$0xf]
    %v71 = vld [vmem:[%s57 + $0x34] sm:$0xf]
    %v72 = vld [vmem:[%s57 + $0x38] sm:$0xf]
    %v73 = vld [vmem:[%s57 + $0x3c] sm:$0xf]
    %v74 = vld [vmem:[%s4] sm:$0xf]
    %v75 = vld [vmem:[%s0] sm:$0xf]
    %v76 = vld [vmem:[%s0 + $0x4] sm:$0xf]
    %v77 = vld [vmem:[%s0 + $0x8] sm:$0xf]
    %v78 = vld [vmem:[%s0 + $0xc] sm:$0xf]
    %v79 = vld [vmem:[%s0 + $0x10] sm:$0xf]
    %v80 = vld [vmem:[%s0 + $0x14] sm:$0xf]
    %v81 = vld [vmem:[%s0 + $0x18] sm:$0xf]
    %v82 = vld [vmem:[%s0 + $0x1c] sm:$0xf]
    %v83 = vld [vmem:[%s0 + $0x20] sm:$0xf]
    %v84 = vld [vmem:[%s0 + $0x24] sm:$0xf]
    %v85 = vld [vmem:[%s0 + $0x28] sm:$0xf]
    %v86 = vld [vmem:[%s0 + $0x2c] sm:$0xf]
    %v87 = vld [vmem:[%s0 + $0x30] sm:$0xf]
    %v88 = vld [vmem:[%s0 + $0x34] sm:$0xf]
    %v89 = vld [vmem:[%s0 + $0x38] sm:$0xf]
    %v90 = vld [vmem:[%s0 + $0x3c] sm:$0xf]
    %v91 = vld [vmem:[%s0 + $0x40] sm:$0xf]
    %v92 = vld [vmem:[%s0 + $0x44] sm:$0xf]
    %v93 = vld [vmem:[%s0 + $0x48] sm:$0xf]
    %v94 = vld [vmem:[%s0 + $0x4c] sm:$0xf]
    %v95 = vld [vmem:[%s0 + $0x50] sm:$0xf]
    %v96 = vld [vmem:[%s0 + $0x54] sm:$0xf]
    %v97 = vld [vmem:[%s0 + $0x58] sm:$0xf]
    %v98 = vld [vmem:[%s0 + $0x5c] sm:$0xf]
    %v99 = vld [vmem:[%s0 + $0x60] sm:$0xf]
    %v100 = vld [vmem:[%s0 + $0x64] sm:$0xf]
    %v101 = vld [vmem:[%s0 + $0x68] sm:$0xf]
    %v102 = vld [vmem:[%s0 + $0x6c] sm:$0xf]
    %v103 = vld [vmem:[%s0 + $0x70] sm:$0xf]
    %v104 = vld [vmem:[%s0 + $0x74] sm:$0xf]
    %v105 = vld [vmem:[%s0 + $0x78] sm:$0xf]
    %v106 = vld [vmem:[%s0 + $0x7c] sm:$0xf]
    %v107 = vld [vmem:[%s0 + $0x80] sm:$0xf]
    %v108 = vld [vmem:[%s0 + $0x84] sm:$0xf]
    %v109 = vld [vmem:[%s0 + $0x88] sm:$0xf]
    %v110 = vld [vmem:[%s0 + $0x8c] sm:$0xf]
    %v111 = vld [vmem:[%s0 + $0x90] sm:$0xf]
    %v112 = vld [vmem:[%s0 + $0x94] sm:$0xf]
    %v113 = vld [vmem:[%s0 + $0x98] sm:$0xf]
    %v114 = vld [vmem:[%s0 + $0x9c] sm:$0xf]
    %v115 = vld [vmem:[%s0 + $0xa0] sm:$0xf]
    %v116 = vld [vmem:[%s0 + $0xa4] sm:$0xf]
    %v117 = vld [vmem:[%s0 + $0xa8] sm:$0xf]
    %v118 = vld [vmem:[%s0 + $0xac] sm:$0xf]
    %v119 = vld [vmem:[%s0 + $0xb0] sm:$0xf]
    %v120 = vld [vmem:[%s0 + $0xb4] sm:$0xf]
    %v121 = vld [vmem:[%s0 + $0xb8] sm:$0xf]
    %v122 = vld [vmem:[%s0 + $0xbc] sm:$0xf]
    %v123 = vld [vmem:[%s0 + $0xc0] sm:$0xf]
    %v124 = vld [vmem:[%s0 + $0xc4] sm:$0xf]
    %v125 = vld [vmem:[%s0 + $0xc8] sm:$0xf]
    %v126 = vld [vmem:[%s0 + $0xcc] sm:$0xf]
    %v127 = vld [vmem:[%s0 + $0xd0] sm:$0xf]
    %v128 = vld [vmem:[%s0 + $0xd4] sm:$0xf]
    %v129 = vld [vmem:[%s0 + $0xd8] sm:$0xf]
    %v130 = vld [vmem:[%s0 + $0xdc] sm:$0xf]
    %v131 = vld [vmem:[%s0 + $0xe0] sm:$0xf]
    %v132 = vld [vmem:[%s0 + $0xe4] sm:$0xf]
    %v133 = vld [vmem:[%s0 + $0xe8] sm:$0xf]
    %v134 = vld [vmem:[%s0 + $0xec] sm:$0xf]
    %v135 = vld [vmem:[%s0 + $0xf0] sm:$0xf]
    %v136 = vld [vmem:[%s0 + $0xf4] sm:$0xf]
    %v137 = vld [vmem:[%s0 + $0xf8] sm:$0xf]
    %v138 = vld [vmem:[%s0 + $0xfc] sm:$0xf]
    %v139 = vlaneseq
    %v140 = vshrl.u32 %v139, 7
    %v141 = vsub.s32 0, %v140
    %v142 = vrot.slane %v74, %v141
    %v207 = vunpack.c.l.b16 %v75
    %v208 = vunpack.c.l.b16 %v76
    %v209 = vunpack.c.l.b16 %v77
    %v210 = vunpack.c.l.b16 %v78
    %v211 = vunpack.c.l.b16 %v79
    %v212 = vunpack.c.l.b16 %v80
    %v213 = vunpack.c.l.b16 %v81
    %v214 = vunpack.c.l.b16 %v82
    %v215 = vunpack.c.l.b16 %v83
    %v216 = vunpack.c.l.b16 %v84
    %v217 = vunpack.c.l.b16 %v85
    %v218 = vunpack.c.l.b16 %v86
    %v219 = vunpack.c.l.b16 %v87
    %v220 = vunpack.c.l.b16 %v88
    %v221 = vunpack.c.l.b16 %v89
    %v222 = vunpack.c.l.b16 %v90
    %v223 = vunpack.c.l.b16 %v91
    %v224 = vunpack.c.l.b16 %v92
    %v225 = vunpack.c.l.b16 %v93
    %v226 = vunpack.c.l.b16 %v94
    %v227 = vunpack.c.l.b16 %v95
    %v228 = vunpack.c.l.b16 %v96
    %v229 = vunpack.c.l.b16 %v97
    %v230 = vunpack.c.l.b16 %v98
    %v231 = vunpack.c.l.b16 %v99
    %v232 = vunpack.c.l.b16 %v100
    %v233 = vunpack.c.l.b16 %v101
    %v234 = vunpack.c.l.b16 %v102
    %v235 = vunpack.c.l.b16 %v103
    %v236 = vunpack.c.l.b16 %v104
    %v237 = vunpack.c.l.b16 %v105
    %v238 = vunpack.c.l.b16 %v106
    %v239 = vunpack.c.l.b16 %v107
    %v240 = vunpack.c.l.b16 %v108
    %v241 = vunpack.c.l.b16 %v109
    %v242 = vunpack.c.l.b16 %v110
    %v243 = vunpack.c.l.b16 %v111
    %v244 = vunpack.c.l.b16 %v112
    %v245 = vunpack.c.l.b16 %v113
    %v246 = vunpack.c.l.b16 %v114
    %v247 = vunpack.c.l.b16 %v115
    %v248 = vunpack.c.l.b16 %v116
    %v249 = vunpack.c.l.b16 %v117
    %v250 = vunpack.c.l.b16 %v118
    %v251 = vunpack.c.l.b16 %v119
    %v252 = vunpack.c.l.b16 %v120
    %v253 = vunpack.c.l.b16 %v121
    %v254 = vunpack.c.l.b16 %v122
    %v255 = vunpack.c.l.b16 %v123
    %v256 = vunpack.c.l.b16 %v124
    %v257 = vunpack.c.l.b16 %v125
    %v258 = vunpack.c.l.b16 %v126
    %v259 = vunpack.c.l.b16 %v127
    %v260 = vunpack.c.l.b16 %v128
    %v261 = vunpack.c.l.b16 %v129
    %v262 = vunpack.c.l.b16 %v130
    %v263 = vunpack.c.l.b16 %v131
    %v264 = vunpack.c.l.b16 %v132
    %v265 = vunpack.c.l.b16 %v133
    %v266 = vunpack.c.l.b16 %v134
    %v267 = vunpack.c.l.b16 %v135
    %v268 = vunpack.c.l.b16 %v136
    %v269 = vunpack.c.l.b16 %v137
    %v270 = vunpack.c.l.b16 %v138
    %v271 = vpack.c.b16 %v208, %v207
    %v272 = vpack.c.b16 %v210, %v209
    %v273 = vpack.c.b16 %v212, %v211
    %v274 = vpack.c.b16 %v214, %v213
    %v275 = vpack.c.b16 %v216, %v215
    %v276 = vpack.c.b16 %v218, %v217
    %v277 = vpack.c.b16 %v220, %v219
    %v278 = vpack.c.b16 %v222, %v221
    %v279 = vpack.c.b16 %v224, %v223
    %v280 = vpack.c.b16 %v226, %v225
    %v281 = vpack.c.b16 %v228, %v227
    %v282 = vpack.c.b16 %v230, %v229
    %v283 = vpack.c.b16 %v232, %v231
    %v284 = vpack.c.b16 %v234, %v233
    %v285 = vpack.c.b16 %v236, %v235
    %v286 = vpack.c.b16 %v238, %v237
    %v287 = vpack.c.b16 %v240, %v239
    %v288 = vpack.c.b16 %v242, %v241
    %v289 = vpack.c.b16 %v244, %v243
    %v290 = vpack.c.b16 %v246, %v245
    %v291 = vpack.c.b16 %v248, %v247
    %v292 = vpack.c.b16 %v250, %v249
    %v293 = vpack.c.b16 %v252, %v251
    %v294 = vpack.c.b16 %v254, %v253
    %v295 = vpack.c.b16 %v256, %v255
    %v296 = vpack.c.b16 %v258, %v257
    %v297 = vpack.c.b16 %v260, %v259
    %v298 = vpack.c.b16 %v262, %v261
    %v299 = vpack.c.b16 %v264, %v263
    %v300 = vpack.c.b16 %v266, %v265
    %v301 = vpack.c.b16 %v268, %v267
    %v302 = vpack.c.b16 %v270, %v269
    %vm303 = vcmask 31744
    %v305 = vsel %vm303, %v271, 0
    %v308 = vsel %vm303, %v272, 0
    %v311 = vsel %vm303, %v273, 0
    %v314 = vsel %vm303, %v274, 0
    %v317 = vsel %vm303, %v275, 0
    %v320 = vsel %vm303, %v276, 0
    %v323 = vsel %vm303, %v277, 0
    %v326 = vsel %vm303, %v278, 0
    %v329 = vsel %vm303, %v279, 0
    %v332 = vsel %vm303, %v280, 0
    %v335 = vsel %vm303, %v281, 0
    %v338 = vsel %vm303, %v282, 0
    %v341 = vsel %vm303, %v283, 0
    %v344 = vsel %vm303, %v284, 0
    %v347 = vsel %vm303, %v285, 0
    %v350 = vsel %vm303, %v286, 0
    %v353 = vsel %vm303, %v287, 0
    %v356 = vsel %vm303, %v288, 0
    %v359 = vsel %vm303, %v289, 0
    %v362 = vsel %vm303, %v290, 0
    %v365 = vsel %vm303, %v291, 0
    %v368 = vsel %vm303, %v292, 0
    %v371 = vsel %vm303, %v293, 0
    %v374 = vsel %vm303, %v294, 0
    %v377 = vsel %vm303, %v295, 0
    %v380 = vsel %vm303, %v296, 0
    %v383 = vsel %vm303, %v297, 0
    %v386 = vsel %vm303, %v298, 0
    %v389 = vsel %vm303, %v299, 0
    %v392 = vsel %vm303, %v300, 0
    %v395 = vsel %vm303, %v301, 0
    %v398 = vsel %vm303, %v302, 0
    %vm400 = vcmask 1041408
    %v402 = vsel %vm400, %v22, 0
    %404 = vmatprep.subr.bf16.mxu0 0
    %405 = vmatpush1.bf16.msra.mxu0 %v402
    %406 = vmatprep.subr.bf16.mxu0 0
    %407 = vmatpush1.bf16.msra.mxu0 0
    %408 = vmatprep.subr.bf16.mxu0 0
    %409 = vmatpush1.bf16.msra.mxu0 0
    %410 = vmatprep.subr.bf16.mxu0 0
    %411 = vmatpush1.bf16.msra.mxu0 0
    %412 = vmatprep.subr.bf16.mxu0 0
    %413 = vmatpush1.bf16.msra.mxu0 0
    %414 = vmatprep.subr.bf16.mxu0 0
    %415 = vmatpush1.bf16.msra.mxu0 0
    %416 = vmatprep.subr.bf16.mxu0 0
    %417 = vmatpush1.bf16.msra.mxu0 0
    %418 = vmatprep.subr.bf16.mxu0 0
    %419 = vmatpush1.bf16.msra.mxu0 0
    %420 = vmatprep.subr.bf16.mxu0 0
    %421 = vmatpush1.bf16.msra.mxu0 0
    %422 = vmatprep.subr.bf16.mxu0 0
    %423 = vmatpush1.bf16.msra.mxu0 0
    %424 = vmatprep.subr.bf16.mxu0 0
    %425 = vmatpush1.bf16.msra.mxu0 0
    %426 = vmatprep.subr.bf16.mxu0 0
    %427 = vmatpush1.bf16.msra.mxu0 0
    %428 = vmatprep.subr.bf16.mxu0 0
    %429 = vmatpush1.bf16.msra.mxu0 0
    %430 = vmatprep.subr.bf16.mxu0 0
    %431 = vmatpush1.bf16.msra.mxu0 0
    %432 = vmatprep.subr.bf16.mxu0 0
    %433 = vmatpush1.bf16.msra.mxu0 0
    %434 = vmatprep.subr.bf16.mxu0 0
    %435 = vmatpush1.bf16.msra.mxu0 0
    %436 = vmatprep.mubr.bf16.mxu0 0
    %437 = vmatmul.mubr.bf16.gmra.mrb[0].mxu0 %v305
    %v438 = vpop.f32.mrb[0].mxu0
    %v439 = vadd.f32 %v142, %v438
    %v440 = vpop.f32.mrb[0].mxu0
    %v441 = vpop.f32.mrb[0].mxu0
    %v442 = vadd.f32 %v142, %v441
    %v443 = vpop.f32.mrb[0].mxu0
    %444 = vmatprep.mubr.bf16.mxu0 0
    %445 = vmatmul.mubr.bf16.gmra.mrb[0].mxu0 %v308
    %v446 = vpop.f32.mrb[0].mxu0
    %v447 = vadd.f32 %v142, %v446
    %v448 = vpop.f32.mrb[0].mxu0
    %v449 = vpop.f32.mrb[0].mxu0
    %v450 = vadd.f32 %v142, %v449
    %v451 = vpop.f32.mrb[0].mxu0
    %452 = vmatprep.mubr.bf16.mxu0 0
    %453 = vmatmul.mubr.bf16.gmra.mrb[0].mxu0 %v311
    %v454 = vpop.f32.mrb[0].mxu0
    %v455 = vadd.f32 %v142, %v454
    %v456 = vpop.f32.mrb[0].mxu0
    %v457 = vpop.f32.mrb[0].mxu0
    %v458 = vadd.f32 %v142, %v457
    %v459 = vpop.f32.mrb[0].mxu0
    %460 = vmatprep.mubr.bf16.mxu0 0
    %461 = vmatmul.mubr.bf16.gmra.mrb[0].mxu0 %v314
    %v462 = vpop.f32.mrb[0].mxu0
    %v463 = vadd.f32 %v142, %v462
    %v464 = vpop.f32.mrb[0].mxu0
    %v465 = vpop.f32.mrb[0].mxu0
    %v466 = vadd.f32 %v142, %v465
    %v467 = vpop.f32.mrb[0].mxu0
    %468 = vmatprep.mubr.bf16.mxu0 0
    %469 = vmatmul.mubr.bf16.gmra.mrb[0].mxu0 %v317
    %v470 = vpop.f32.mrb[0].mxu0
    %v471 = vadd.f32 %v142, %v470
    %v472 = vpop.f32.mrb[0].mxu0
    %v473 = vpop.f32.mrb[0].mxu0
    %v474 = vadd.f32 %v142, %v473
    %v475 = vpop.f32.mrb[0].mxu0
    %476 = vmatprep.mubr.bf16.mxu0 0
    %477 = vmatmul.mubr.bf16.gmra.mrb[0].mxu0 %v320
    %v478 = vpop.f32.mrb[0].mxu0
    %v479 = vadd.f32 %v142, %v478
    %v480 = vpop.f32.mrb[0].mxu0
    %v481 = vpop.f32.mrb[0].mxu0
    %v482 = vadd.f32 %v142, %v481
    %v483 = vpop.f32.mrb[0].mxu0
    %484 = vmatprep.mubr.bf16.mxu0 0
    %485 = vmatmul.mubr.bf16.gmra.mrb[0].mxu0 %v323
    %v486 = vpop.f32.mrb[0].mxu0
    %v487 = vadd.f32 %v142, %v486
    %v488 = vpop.f32.mrb[0].mxu0
    %v489 = vpop.f32.mrb[0].mxu0
    %v490 = vadd.f32 %v142, %v489
    %v491 = vpop.f32.mrb[0].mxu0
    %492 = vmatprep.mubr.bf16.mxu0 0
    %493 = vmatmul.mubr.bf16.gmra.mrb[0].mxu0 %v326
    %v494 = vpop.f32.mrb[0].mxu0
    %v495 = vadd.f32 %v142, %v494
    %v496 = vpop.f32.mrb[0].mxu0
    %v497 = vpop.f32.mrb[0].mxu0
    %v498 = vadd.f32 %v142, %v497
    %v499 = vpop.f32.mrb[0].mxu0
    %500 = vmatprep.mubr.bf16.mxu0 0
    %501 = vmatmul.mubr.bf16.gmra.mrb[0].mxu0 %v329
    %v502 = vpop.f32.mrb[0].mxu0
    %v503 = vadd.f32 %v142, %v502
    %v504 = vpop.f32.mrb[0].mxu0
    %v505 = vpop.f32.mrb[0].mxu0
    %v506 = vadd.f32 %v142, %v505
    %v507 = vpop.f32.mrb[0].mxu0
    %508 = vmatprep.mubr.bf16.mxu0 0
    %509 = vmatmul.mubr.bf16.gmra.mrb[0].mxu0 %v332
    %v510 = vpop.f32.mrb[0].mxu0
    %v511 = vadd.f32 %v142, %v510
    %v512 = vpop.f32.mrb[0].mxu0
    %v513 = vpop.f32.mrb[0].mxu0
    %v514 = vadd.f32 %v142, %v513
    %v515 = vpop.f32.mrb[0].mxu0
    %516 = vmatprep.mubr.bf16.mxu0 0
    %517 = vmatmul.mubr.bf16.gmra.mrb[0].mxu0 %v335
    %v518 = vpop.f32.mrb[0].mxu0
    %v519 = vadd.f32 %v142, %v518
    %v520 = vpop.f32.mrb[0].mxu0
    %v521 = vpop.f32.mrb[0].mxu0
    %v522 = vadd.f32 %v142, %v521
    %v523 = vpop.f32.mrb[0].mxu0
    %524 = vmatprep.mubr.bf16.mxu0 0
    %525 = vmatmul.mubr.bf16.gmra.mrb[0].mxu0 %v338
    %v526 = vpop.f32.mrb[0].mxu0
    %v527 = vadd.f32 %v142, %v526
    %v528 = vpop.f32.mrb[0].mxu0
    %v529 = vpop.f32.mrb[0].mxu0
    %v530 = vadd.f32 %v142, %v529
    %v531 = vpop.f32.mrb[0].mxu0
    %532 = vmatprep.mubr.bf16.mxu0 0
    %533 = vmatmul.mubr.bf16.gmra.mrb[0].mxu0 %v341
    %v534 = vpop.f32.mrb[0].mxu0
    %v535 = vadd.f32 %v142, %v534
    %v536 = vpop.f32.mrb[0].mxu0
    %v537 = vpop.f32.mrb[0].mxu0
    %v538 = vadd.f32 %v142, %v537
    %v539 = vpop.f32.mrb[0].mxu0
    %540 = vmatprep.mubr.bf16.mxu0 0
    %541 = vmatmul.mubr.bf16.gmra.mrb[0].mxu0 %v344
    %v542 = vpop.f32.mrb[0].mxu0
    %v543 = vadd.f32 %v142, %v542
    %v544 = vpop.f32.mrb[0].mxu0
    %v545 = vpop.f32.mrb[0].mxu0
    %v546 = vadd.f32 %v142, %v545
    %v547 = vpop.f32.mrb[0].mxu0
    %548 = vmatprep.mubr.bf16.mxu0 0
    %549 = vmatmul.mubr.bf16.gmra.mrb[0].mxu0 %v347
    %v550 = vpop.f32.mrb[0].mxu0
    %v551 = vadd.f32 %v142, %v550
    %v552 = vpop.f32.mrb[0].mxu0
    %v553 = vpop.f32.mrb[0].mxu0
    %v554 = vadd.f32 %v142, %v553
    %v555 = vpop.f32.mrb[0].mxu0
    %556 = vmatprep.mubr.bf16.mxu0 0
    %557 = vmatmul.mubr.bf16.gmra.mrb[0].mxu0 %v350
    %v558 = vpop.f32.mrb[0].mxu0
    %v559 = vadd.f32 %v142, %v558
    %v560 = vpop.f32.mrb[0].mxu0
    %v561 = vpop.f32.mrb[0].mxu0
    %v562 = vadd.f32 %v142, %v561
    %v563 = vpop.f32.mrb[0].mxu0
    %564 = vmatprep.mubr.bf16.mxu0 0
    %565 = vmatmul.mubr.bf16.gmra.mrb[0].mxu0 %v353
    %v566 = vpop.f32.mrb[0].mxu0
    %v567 = vadd.f32 %v142, %v566
    %v568 = vpop.f32.mrb[0].mxu0
    %v569 = vpop.f32.mrb[0].mxu0
    %v570 = vadd.f32 %v142, %v569
    %v571 = vpop.f32.mrb[0].mxu0
    %572 = vmatprep.mubr.bf16.mxu0 0
    %573 = vmatmul.mubr.bf16.gmra.mrb[0].mxu0 %v356
    %v574 = vpop.f32.mrb[0].mxu0
    %v575 = vadd.f32 %v142, %v574
    %v576 = vpop.f32.mrb[0].mxu0
    %v577 = vpop.f32.mrb[0].mxu0
    %v578 = vadd.f32 %v142, %v577
    %v579 = vpop.f32.mrb[0].mxu0
    %580 = vmatprep.mubr.bf16.mxu0 0
    %581 = vmatmul.mubr.bf16.gmra.mrb[0].mxu0 %v359
    %v582 = vpop.f32.mrb[0].mxu0
    %v583 = vadd.f32 %v142, %v582
    %v584 = vpop.f32.mrb[0].mxu0
    %v585 = vpop.f32.mrb[0].mxu0
    %v586 = vadd.f32 %v142, %v585
    %v587 = vpop.f32.mrb[0].mxu0
    %588 = vmatprep.mubr.bf16.mxu0 0
    %589 = vmatmul.mubr.bf16.gmra.mrb[0].mxu0 %v362
    %v590 = vpop.f32.mrb[0].mxu0
    %v591 = vadd.f32 %v142, %v590
    %v592 = vpop.f32.mrb[0].mxu0
    %v593 = vpop.f32.mrb[0].mxu0
    %v594 = vadd.f32 %v142, %v593
    %v595 = vpop.f32.mrb[0].mxu0
    %596 = vmatprep.mubr.bf16.mxu0 0
    %597 = vmatmul.mubr.bf16.gmra.mrb[0].mxu0 %v365
    %v598 = vpop.f32.mrb[0].mxu0
    %v599 = vadd.f32 %v142, %v598
    %v600 = vpop.f32.mrb[0].mxu0
    %v601 = vpop.f32.mrb[0].mxu0
    %v602 = vadd.f32 %v142, %v601
    %v603 = vpop.f32.mrb[0].mxu0
    %604 = vmatprep.mubr.bf16.mxu0 0
    %605 = vmatmul.mubr.bf16.gmra.mrb[0].mxu0 %v368
    %v606 = vpop.f32.mrb[0].mxu0
    %v607 = vadd.f32 %v142, %v606
    %v608 = vpop.f32.mrb[0].mxu0
    %v609 = vpop.f32.mrb[0].mxu0
    %v610 = vadd.f32 %v142, %v609
    %v611 = vpop.f32.mrb[0].mxu0
    %612 = vmatprep.mubr.bf16.mxu0 0
    %613 = vmatmul.mubr.bf16.gmra.mrb[0].mxu0 %v371
    %v614 = vpop.f32.mrb[0].mxu0
    %v615 = vadd.f32 %v142, %v614
    %v616 = vpop.f32.mrb[0].mxu0
    %v617 = vpop.f32.mrb[0].mxu0
    %v618 = vadd.f32 %v142, %v617
    %v619 = vpop.f32.mrb[0].mxu0
    %620 = vmatprep.mubr.bf16.mxu0 0
    %621 = vmatmul.mubr.bf16.gmra.mrb[0].mxu0 %v374
    %v622 = vpop.f32.mrb[0].mxu0
    %v623 = vadd.f32 %v142, %v622
    %v624 = vpop.f32.mrb[0].mxu0
    %v625 = vpop.f32.mrb[0].mxu0
    %v626 = vadd.f32 %v142, %v625
    %v627 = vpop.f32.mrb[0].mxu0
    %628 = vmatprep.mubr.bf16.mxu0 0
    %629 = vmatmul.mubr.bf16.gmra.mrb[0].mxu0 %v377
    %v630 = vpop.f32.mrb[0].mxu0
    %v631 = vadd.f32 %v142, %v630
    %v632 = vpop.f32.mrb[0].mxu0
    %v633 = vpop.f32.mrb[0].mxu0
    %v634 = vadd.f32 %v142, %v633
    %v635 = vpop.f32.mrb[0].mxu0
    %636 = vmatprep.mubr.bf16.mxu0 0
    %637 = vmatmul.mubr.bf16.gmra.mrb[0].mxu0 %v380
    %v638 = vpop.f32.mrb[0].mxu0
    %v639 = vadd.f32 %v142, %v638
    %v640 = vpop.f32.mrb[0].mxu0
    %v641 = vpop.f32.mrb[0].mxu0
    %v642 = vadd.f32 %v142, %v641
    %v643 = vpop.f32.mrb[0].mxu0
    %644 = vmatprep.mubr.bf16.mxu0 0
    %645 = vmatmul.mubr.bf16.gmra.mrb[0].mxu0 %v383
    %v646 = vpop.f32.mrb[0].mxu0
    %v647 = vadd.f32 %v142, %v646
    %v648 = vpop.f32.mrb[0].mxu0
    %v649 = vpop.f32.mrb[0].mxu0
    %v650 = vadd.f32 %v142, %v649
    %v651 = vpop.f32.mrb[0].mxu0
    %652 = vmatprep.mubr.bf16.mxu0 0
    %653 = vmatmul.mubr.bf16.gmra.mrb[0].mxu0 %v386
    %v654 = vpop.f32.mrb[0].mxu0
    %v655 = vadd.f32 %v142, %v654
    %v656 = vpop.f32.mrb[0].mxu0
    %v657 = vpop.f32.mrb[0].mxu0
    %v658 = vadd.f32 %v142, %v657
    %v659 = vpop.f32.mrb[0].mxu0
    %660 = vmatprep.mubr.bf16.mxu0 0
    %661 = vmatmul.mubr.bf16.gmra.mrb[0].mxu0 %v389
    %v662 = vpop.f32.mrb[0].mxu0
    %v663 = vadd.f32 %v142, %v662
    %v664 = vpop.f32.mrb[0].mxu0
    %v665 = vpop.f32.mrb[0].mxu0
    %v666 = vadd.f32 %v142, %v665
    %v667 = vpop.f32.mrb[0].mxu0
    %668 = vmatprep.mubr.bf16.mxu0 0
    %669 = vmatmul.mubr.bf16.gmra.mrb[0].mxu0 %v392
    %v670 = vpop.f32.mrb[0].mxu0
    %v671 = vadd.f32 %v142, %v670
    %v672 = vpop.f32.mrb[0].mxu0
    %v673 = vpop.f32.mrb[0].mxu0
    %v674 = vadd.f32 %v142, %v673
    %v675 = vpop.f32.mrb[0].mxu0
    %676 = vmatprep.mubr.bf16.mxu0 0
    %677 = vmatmul.mubr.bf16.gmra.mrb[0].mxu0 %v395
    %v678 = vpop.f32.mrb[0].mxu0
    %v679 = vadd.f32 %v142, %v678
    %v680 = vpop.f32.mrb[0].mxu0
    %v681 = vpop.f32.mrb[0].mxu0
    %v682 = vadd.f32 %v142, %v681
    %v683 = vpop.f32.mrb[0].mxu0
    %684 = vmatprep.mubr.bf16.mxu0 0
    %685 = vmatmul.mubr.bf16.gmra.mrb[0].mxu0 %v398
    %v686 = vpop.f32.mrb[0].mxu0
    %v687 = vadd.f32 %v142, %v686
    %v688 = vpop.f32.mrb[0].mxu0
    %v689 = vpop.f32.mrb[0].mxu0
    %v690 = vadd.f32 %v142, %v689
    %v691 = vpop.f32.mrb[0].mxu0
    %692 = vdwg.mxu0
    %v693 = vmax.f32 %v439, 0.0
    %v694 = vmax.f32 %v442, 0.0
    %v695 = vmax.f32 %v447, 0.0
    %v696 = vmax.f32 %v450, 0.0
    %v697 = vmax.f32 %v455, 0.0
    %v698 = vmax.f32 %v458, 0.0
    %v699 = vmax.f32 %v463, 0.0
    %v700 = vmax.f32 %v466, 0.0
    %v701 = vmax.f32 %v471, 0.0
    %v702 = vmax.f32 %v474, 0.0
    %v703 = vmax.f32 %v479, 0.0
    %v704 = vmax.f32 %v482, 0.0
    %v705 = vmax.f32 %v487, 0.0
    %v706 = vmax.f32 %v490, 0.0
    %v707 = vmax.f32 %v495, 0.0
    %v708 = vmax.f32 %v498, 0.0
    %v709 = vmax.f32 %v503, 0.0
    %v710 = vmax.f32 %v506, 0.0
    %v711 = vmax.f32 %v511, 0.0
    %v712 = vmax.f32 %v514, 0.0
    %v713 = vmax.f32 %v519, 0.0
    %v714 = vmax.f32 %v522, 0.0
    %v715 = vmax.f32 %v527, 0.0
    %v716 = vmax.f32 %v530, 0.0
    %v717 = vmax.f32 %v535, 0.0
    %v718 = vmax.f32 %v538, 0.0
    %v719 = vmax.f32 %v543, 0.0
    %v720 = vmax.f32 %v546, 0.0
    %v721 = vmax.f32 %v551, 0.0
    %v722 = vmax.f32 %v554, 0.0
    %v723 = vmax.f32 %v559, 0.0
    %v724 = vmax.f32 %v562, 0.0
    %v725 = vmax.f32 %v567, 0.0
    %v726 = vmax.f32 %v570, 0.0
    %v727 = vmax.f32 %v575, 0.0
    %v728 = vmax.f32 %v578, 0.0
    %v729 = vmax.f32 %v583, 0.0
    %v730 = vmax.f32 %v586, 0.0
    %v731 = vmax.f32 %v591, 0.0
    %v732 = vmax.f32 %v594, 0.0
    %v733 = vmax.f32 %v599, 0.0
    %v734 = vmax.f32 %v602, 0.0
    %v735 = vmax.f32 %v607, 0.0
    %v736 = vmax.f32 %v610, 0.0
    %v737 = vmax.f32 %v615, 0.0
    %v738 = vmax.f32 %v618, 0.0
    %v739 = vmax.f32 %v623, 0.0
    %v740 = vmax.f32 %v626, 0.0
    %v741 = vmax.f32 %v631, 0.0
    %v742 = vmax.f32 %v634, 0.0
    %v743 = vmax.f32 %v639, 0.0
    %v744 = vmax.f32 %v642, 0.0
    %v745 = vmax.f32 %v647, 0.0
    %v746 = vmax.f32 %v650, 0.0
    %v747 = vmax.f32 %v655, 0.0
    %v748 = vmax.f32 %v658, 0.0
    %v749 = vmax.f32 %v663, 0.0
    %v750 = vmax.f32 %v666, 0.0
    %v751 = vmax.f32 %v671, 0.0
    %v752 = vmax.f32 %v674, 0.0
    %v753 = vmax.f32 %v679, 0.0
    %v754 = vmax.f32 %v682, 0.0
    %v755 = vmax.f32 %v687, 0.0
    %v756 = vmax.f32 %v690, 0.0
    %v757 = vadd.f32 %v693, %v694
    %v758 = vadd.f32 %v757, %v695
    %v759 = vadd.f32 %v758, %v696
    %v760 = vadd.f32 %v759, %v697
    %v761 = vadd.f32 %v760, %v698
    %v762 = vadd.f32 %v761, %v699
    %v763 = vadd.f32 %v762, %v700
    %v764 = vadd.f32 %v763, %v701
    %v765 = vadd.f32 %v764, %v702
    %v766 = vadd.f32 %v765, %v703
    %v767 = vadd.f32 %v766, %v704
    %v768 = vadd.f32 %v767, %v705
    %v769 = vadd.f32 %v768, %v706
    %v770 = vadd.f32 %v769, %v707
    %v771 = vadd.f32 %v770, %v708
    %v772 = vadd.f32 %v771, %v709
    %v773 = vadd.f32 %v772, %v710
    %v774 = vadd.f32 %v773, %v711
    %v775 = vadd.f32 %v774, %v712
    %v776 = vadd.f32 %v775, %v713
    %v777 = vadd.f32 %v776, %v714
    %v778 = vadd.f32 %v777, %v715
    %v779 = vadd.f32 %v778, %v716
    %v780 = vadd.f32 %v779, %v717
    %v781 = vadd.f32 %v780, %v718
    %v782 = vadd.f32 %v781, %v719
    %v783 = vadd.f32 %v782, %v720
    %v784 = vadd.f32 %v783, %v721
    %v785 = vadd.f32 %v784, %v722
    %v786 = vadd.f32 %v785, %v723
    %v787 = vadd.f32 %v786, %v724
    %v788 = vrot.slane %v787, 4
    %v789 = vadd.f32 %v787, %v788
    %v790 = vrot.slane %v789, 2
    %v791 = vadd.f32 %v789, %v790
    %v792 = vrot.slane %v791, 1
    %v793 = vadd.f32 %v791, %v792
    %v794 = vadd.f32 %v725, %v726
    %v795 = vadd.f32 %v794, %v727
    %v796 = vadd.f32 %v795, %v728
    %v797 = vadd.f32 %v796, %v729
    %v798 = vadd.f32 %v797, %v730
    %v799 = vadd.f32 %v798, %v731
    %v800 = vadd.f32 %v799, %v732
    %v801 = vadd.f32 %v800, %v733
    %v802 = vadd.f32 %v801, %v734
    %v803 = vadd.f32 %v802, %v735
    %v804 = vadd.f32 %v803, %v736
    %v805 = vadd.f32 %v804, %v737
    %v806 = vadd.f32 %v805, %v738
    %v807 = vadd.f32 %v806, %v739
    %v808 = vadd.f32 %v807, %v740
    %v809 = vadd.f32 %v808, %v741
    %v810 = vadd.f32 %v809, %v742
    %v811 = vadd.f32 %v810, %v743
    %v812 = vadd.f32 %v811, %v744
    %v813 = vadd.f32 %v812, %v745
    %v814 = vadd.f32 %v813, %v746
    %v815 = vadd.f32 %v814, %v747
    %v816 = vadd.f32 %v815, %v748
    %v817 = vadd.f32 %v816, %v749
    %v818 = vadd.f32 %v817, %v750
    %v819 = vadd.f32 %v818, %v751
    %v820 = vadd.f32 %v819, %v752
    %v821 = vadd.f32 %v820, %v753
    %v822 = vadd.f32 %v821, %v754
    %v823 = vadd.f32 %v822, %v755
    %v824 = vadd.f32 %v823, %v756
    %v825 = vrot.slane %v824, 4
    %v826 = vadd.f32 %v824, %v825
    %v827 = vrot.slane %v826, 2
    %v828 = vadd.f32 %v826, %v827
    %v829 = vrot.slane %v828, 1
    %v830 = vadd.f32 %v828, %v829
    %v831 = vrcp.pop 256.0
    %v832 = vmul.f32 %v793, %v831
    %v833 = vmul.f32 %v830, %v831
    %vm836 = vcmask 1041409
    %v837 = vsel %vm836, %v833, %v832
    %839 = vst [vmem:[#allocation2] sm:$0x3] %v837
    %v840 = vld [vmem:[%s1] sm:$0xf]
    %v841 = vld [vmem:[%s1 + $0x4] sm:$0xf]
    %v842 = vld [vmem:[%s1 + $0x8] sm:$0xf]
    %v843 = vld [vmem:[%s1 + $0xc] sm:$0xf]
    %v844 = vld [vmem:[%s1 + $0x10] sm:$0xf]
    %v845 = vld [vmem:[%s1 + $0x14] sm:$0xf]
    %v846 = vld [vmem:[%s1 + $0x18] sm:$0xf]
    %v847 = vld [vmem:[%s1 + $0x1c] sm:$0xf]
    %v848 = vld [vmem:[%s1 + $0x20] sm:$0xf]
    %v849 = vld [vmem:[%s1 + $0x24] sm:$0xf]
    %v850 = vld [vmem:[%s1 + $0x28] sm:$0xf]
    %v851 = vld [vmem:[%s1 + $0x2c] sm:$0xf]
    %v852 = vld [vmem:[%s1 + $0x30] sm:$0xf]
    %v853 = vld [vmem:[%s1 + $0x34] sm:$0xf]
    %v854 = vld [vmem:[%s1 + $0x38] sm:$0xf]
    %v855 = vld [vmem:[%s1 + $0x3c] sm:$0xf]
    %v872 = vunpack.c.l.b16 %v840
    %v873 = vunpack.c.l.b16 %v841
    %v874 = vunpack.c.l.b16 %v842
    %v875 = vunpack.c.l.b16 %v843
    %v876 = vunpack.c.l.b16 %v844
    %v877 = vunpack.c.l.b16 %v845
    %v878 = vunpack.c.l.b16 %v846
    %v879 = vunpack.c.l.b16 %v847
    %v880 = vunpack.c.l.b16 %v848
    %v881 = vunpack.c.l.b16 %v849
    %v882 = vunpack.c.l.b16 %v850
    %v883 = vunpack.c.l.b16 %v851
    %v884 = vunpack.c.l.b16 %v852
    %v885 = vunpack.c.l.b16 %v853
    %v886 = vunpack.c.l.b16 %v854
    %v887 = vunpack.c.l.b16 %v855
    %v888 = vpack.c.b16 %v873, %v872
    %v889 = vpack.c.b16 %v875, %v874
    %v890 = vpack.c.b16 %v877, %v876
    %v891 = vpack.c.b16 %v879, %v878
    %v892 = vpack.c.b16 %v881, %v880
    %v893 = vpack.c.b16 %v883, %v882
    %v894 = vpack.c.b16 %v885, %v884
    %v895 = vpack.c.b16 %v887, %v886
    %v897 = vsel %vm303, %v888, 0
    %v900 = vsel %vm303, %v889, 0
    %v903 = vsel %vm303, %v890, 0
    %v906 = vsel %vm303, %v891, 0
    %v909 = vsel %vm303, %v892, 0
    %v912 = vsel %vm303, %v893, 0
    %v915 = vsel %vm303, %v894, 0
    %v918 = vsel %vm303, %v895, 0
    %920 = vmatprep.subr.bf16.mxu0 0
    %921 = vmatpush1.bf16.msra.mxu0 %v402
    %922 = vmatprep.subr.bf16.mxu0 0
    %923 = vmatpush1.bf16.msra.mxu0 0
    %924 = vmatprep.subr.bf16.mxu0 0
    %925 = vmatpush1.bf16.msra.mxu0 0
    %926 = vmatprep.subr.bf16.mxu0 0
    %927 = vmatpush1.bf16.msra.mxu0 0
    %928 = vmatprep.subr.bf16.mxu0 0
    %929 = vmatpush1.bf16.msra.mxu0 0
    %930 = vmatprep.subr.bf16.mxu0 0
    %931 = vmatpush1.bf16.msra.mxu0 0
    %932 = vmatprep.subr.bf16.mxu0 0
    %933 = vmatpush1.bf16.msra.mxu0 0
    %934 = vmatprep.subr.bf16.mxu0 0
    %935 = vmatpush1.bf16.msra.mxu0 0
    %936 = vmatprep.subr.bf16.mxu0 0
    %937 = vmatpush1.bf16.msra.mxu0 0
    %938 = vmatprep.subr.bf16.mxu0 0
    %939 = vmatpush1.bf16.msra.mxu0 0
    %940 = vmatprep.subr.bf16.mxu0 0
    %941 = vmatpush1.bf16.msra.mxu0 0
    %942 = vmatprep.subr.bf16.mxu0 0
    %943 = vmatpush1.bf16.msra.mxu0 0
    %944 = vmatprep.subr.bf16.mxu0 0
    %945 = vmatpush1.bf16.msra.mxu0 0
    %946 = vmatprep.subr.bf16.mxu0 0
    %947 = vmatpush1.bf16.msra.mxu0 0
    %948 = vmatprep.subr.bf16.mxu0 0
    %949 = vmatpush1.bf16.msra.mxu0 0
    %950 = vmatprep.subr.bf16.mxu0 0
    %951 = vmatpush1.bf16.msra.mxu0 0
    %952 = vmatprep.mubr.bf16.mxu0 0
    %953 = vmatmul.mubr.bf16.gmra.mrb[0].mxu0 %v897
    %v954 = vpop.f32.mrb[0].mxu0
    %v955 = vadd.f32 %v142, %v954
    %v956 = vpop.f32.mrb[0].mxu0
    %v957 = vpop.f32.mrb[0].mxu0
    %v958 = vadd.f32 %v142, %v957
    %v959 = vpop.f32.mrb[0].mxu0
    %960 = vmatprep.mubr.bf16.mxu0 0
    %961 = vmatmul.mubr.bf16.gmra.mrb[0].mxu0 %v900
    %v962 = vpop.f32.mrb[0].mxu0
    %v963 = vadd.f32 %v142, %v962
    %v964 = vpop.f32.mrb[0].mxu0
    %v965 = vpop.f32.mrb[0].mxu0
    %v966 = vadd.f32 %v142, %v965
    %v967 = vpop.f32.mrb[0].mxu0
    %968 = vmatprep.mubr.bf16.mxu0 0
    %969 = vmatmul.mubr.bf16.gmra.mrb[0].mxu0 %v903
    %v970 = vpop.f32.mrb[0].mxu0
    %v971 = vadd.f32 %v142, %v970
    %v972 = vpop.f32.mrb[0].mxu0
    %v973 = vpop.f32.mrb[0].mxu0
    %v974 = vadd.f32 %v142, %v973
    %v975 = vpop.f32.mrb[0].mxu0
    %976 = vmatprep.mubr.bf16.mxu0 0
    %977 = vmatmul.mubr.bf16.gmra.mrb[0].mxu0 %v906
    %v978 = vpop.f32.mrb[0].mxu0
    %v979 = vadd.f32 %v142, %v978
    %v980 = vpop.f32.mrb[0].mxu0
    %v981 = vpop.f32.mrb[0].mxu0
    %v982 = vadd.f32 %v142, %v981
    %v983 = vpop.f32.mrb[0].mxu0
    %984 = vmatprep.mubr.bf16.mxu0 0
    %985 = vmatmul.mubr.bf16.gmra.mrb[0].mxu0 %v909
    %v986 = vpop.f32.mrb[0].mxu0
    %v987 = vadd.f32 %v142, %v986
    %v988 = vpop.f32.mrb[0].mxu0
    %v989 = vpop.f32.mrb[0].mxu0
    %v990 = vadd.f32 %v142, %v989
    %v991 = vpop.f32.mrb[0].mxu0
    %992 = vmatprep.mubr.bf16.mxu0 0
    %993 = vmatmul.mubr.bf16.gmra.mrb[0].mxu0 %v912
    %v994 = vpop.f32.mrb[0].mxu0
    %v995 = vadd.f32 %v142, %v994
    %v996 = vpop.f32.mrb[0].mxu0
    %v997 = vpop.f32.mrb[0].mxu0
    %v998 = vadd.f32 %v142, %v997
    %v999 = vpop.f32.mrb[0].mxu0
    %1000 = vmatprep.mubr.bf16.mxu0 0
    %1001 = vmatmul.mubr.bf16.gmra.mrb[0].mxu0 %v915
    %v1002 = vpop.f32.mrb[0].mxu0
    %v1003 = vadd.f32 %v142, %v1002
    %v1004 = vpop.f32.mrb[0].mxu0
    %v1005 = vpop.f32.mrb[0].mxu0
    %v1006 = vadd.f32 %v142, %v1005
    %v1007 = vpop.f32.mrb[0].mxu0
    %1008 = vmatprep.mubr.bf16.mxu0 0
    %1009 = vmatmul.mubr.bf16.gmra.mrb[0].mxu0 %v918
    %v1010 = vpop.f32.mrb[0].mxu0
    %v1011 = vadd.f32 %v142, %v1010
    %v1012 = vpop.f32.mrb[0].mxu0
    %v1013 = vpop.f32.mrb[0].mxu0
    %v1014 = vadd.f32 %v142, %v1013
    %v1015 = vpop.f32.mrb[0].mxu0
    %1016 = vdwg.mxu0
    %v1017 = vmax.f32 %v955, 0.0
    %v1018 = vmax.f32 %v958, 0.0
    %v1019 = vmax.f32 %v963, 0.0
    %v1020 = vmax.f32 %v966, 0.0
    %v1021 = vmax.f32 %v971, 0.0
    %v1022 = vmax.f32 %v974, 0.0
    %v1023 = vmax.f32 %v979, 0.0
    %v1024 = vmax.f32 %v982, 0.0
    %v1025 = vmax.f32 %v987, 0.0
    %v1026 = vmax.f32 %v990, 0.0
    %v1027 = vmax.f32 %v995, 0.0
    %v1028 = vmax.f32 %v998, 0.0
    %v1029 = vmax.f32 %v1003, 0.0
    %v1030 = vmax.f32 %v1006, 0.0
    %v1031 = vmax.f32 %v1011, 0.0
    %v1032 = vmax.f32 %v1014, 0.0
    %v1033 = vpack.c.bf16 %v1018, %v1017
    %v1034 = vpack.c.bf16 %v1020, %v1019
    %v1035 = vpack.c.bf16 %v1022, %v1021
    %v1036 = vpack.c.bf16 %v1024, %v1023
    %v1037 = vpack.c.bf16 %v1026, %v1025
    %v1038 = vpack.c.bf16 %v1028, %v1027
    %v1039 = vpack.c.bf16 %v1030, %v1029
    %v1040 = vpack.c.bf16 %v1032, %v1031
    %v1041 = vlaneseq
    %v1042 = vshrl.u32 %v1041, 7
    %v1043 = vsub.s32 1, %v1042
    %v1044 = vrot.slane %v74, %v1043
    %v1061 = vunpack.c.l.b16 %v24
    %v1062 = vunpack.c.l.b16 %v25
    %v1063 = vunpack.c.l.b16 %v26
    %v1064 = vunpack.c.l.b16 %v27
    %v1065 = vunpack.c.l.b16 %v28
    %v1066 = vunpack.c.l.b16 %v29
    %v1067 = vunpack.c.l.b16 %v30
    %v1068 = vunpack.c.l.b16 %v31
    %v1069 = vunpack.c.l.b16 %v32
    %v1070 = vunpack.c.l.b16 %v33
    %v1071 = vunpack.c.l.b16 %v34
    %v1072 = vunpack.c.l.b16 %v35
    %v1073 = vunpack.c.l.b16 %v36
    %v1074 = vunpack.c.l.b16 %v37
    %v1075 = vunpack.c.l.b16 %v38
    %v1076 = vunpack.c.l.b16 %v39
    %v1077 = vpack.c.b16 %v1062, %v1061
    %v1078 = vpack.c.b16 %v1064, %v1063
    %v1079 = vpack.c.b16 %v1066, %v1065
    %v1080 = vpack.c.b16 %v1068, %v1067
    %v1081 = vpack.c.b16 %v1070, %v1069
    %v1082 = vpack.c.b16 %v1072, %v1071
    %v1083 = vpack.c.b16 %v1074, %v1073
    %v1084 = vpack.c.b16 %v1076, %v1075
    %1093 = vmatprep.subr.bf16.mxu0 0
    %1094 = vmatpush1.bf16.msra.mxu0 %v1077
    %1095 = vmatprep.subr.bf16.mxu0 0
    %1096 = vmatpush1.bf16.msra.mxu0 %v1078
    %1097 = vmatprep.subr.bf16.mxu0 0
    %1098 = vmatpush1.bf16.msra.mxu0 %v1079
    %1099 = vmatprep.subr.bf16.mxu0 0
    %1100 = vmatpush1.bf16.msra.mxu0 %v1080
    %1101 = vmatprep.subr.bf16.mxu0 0
    %1102 = vmatpush1.bf16.msra.mxu0 %v1081
    %1103 = vmatprep.subr.bf16.mxu0 0
    %1104 = vmatpush1.bf16.msra.mxu0 %v1082
    %1105 = vmatprep.subr.bf16.mxu0 0
    %1106 = vmatpush1.bf16.msra.mxu0 %v1083
    %1107 = vmatprep.subr.bf16.mxu0 0
    %1108 = vmatpush1.bf16.msra.mxu0 %v1084
    %1109 = vmatprep.subr.bf16.mxu0 0
    %1110 = vmatpush1.bf16.msra.mxu0 0
    %1111 = vmatprep.subr.bf16.mxu0 0
    %1112 = vmatpush1.bf16.msra.mxu0 0
    %1113 = vmatprep.subr.bf16.mxu0 0
    %1114 = vmatpush1.bf16.msra.mxu0 0
    %1115 = vmatprep.subr.bf16.mxu0 0
    %1116 = vmatpush1.bf16.msra.mxu0 0
    %1117 = vmatprep.subr.bf16.mxu0 0
    %1118 = vmatpush1.bf16.msra.mxu0 0
    %1119 = vmatprep.subr.bf16.mxu0 0
    %1120 = vmatpush1.bf16.msra.mxu0 0
    %1121 = vmatprep.subr.bf16.mxu0 0
    %1122 = vmatpush1.bf16.msra.mxu0 0
    %1123 = vmatprep.subr.bf16.mxu0 0
    %1124 = vmatpush1.bf16.msra.mxu0 0
    %1125 = vmatprep.mubr.bf16.mxu0 0
    %1126 = vmatmul.mubr.bf16.gmra.mrb[0].mxu0 %v1033
    %v1127 = vpop.f32.mrb[0].mxu0
    %v1128 = vadd.f32 %v1044, %v1127
    %v1129 = vpop.f32.mrb[0].mxu0
    %v1130 = vpop.f32.mrb[0].mxu0
    %v1131 = vadd.f32 %v1044, %v1130
    %v1132 = vpop.f32.mrb[0].mxu0
    %1133 = vmatprep.mubr.bf16.mxu0 0
    %1134 = vmatmul.mubr.bf16.gmra.mrb[0].mxu0 %v1034
    %v1135 = vpop.f32.mrb[0].mxu0
    %v1136 = vadd.f32 %v1044, %v1135
    %v1137 = vpop.f32.mrb[0].mxu0
    %v1138 = vpop.f32.mrb[0].mxu0
    %v1139 = vadd.f32 %v1044, %v1138
    %v1140 = vpop.f32.mrb[0].mxu0
    %1141 = vmatprep.mubr.bf16.mxu0 0
    %1142 = vmatmul.mubr.bf16.gmra.mrb[0].mxu0 %v1035
    %v1143 = vpop.f32.mrb[0].mxu0
    %v1144 = vadd.f32 %v1044, %v1143
    %v1145 = vpop.f32.mrb[0].mxu0
    %v1146 = vpop.f32.mrb[0].mxu0
    %v1147 = vadd.f32 %v1044, %v1146
    %v1148 = vpop.f32.mrb[0].mxu0
    %1149 = vmatprep.mubr.bf16.mxu0 0
    %1150 = vmatmul.mubr.bf16.gmra.mrb[0].mxu0 %v1036
    %v1151 = vpop.f32.mrb[0].mxu0
    %v1152 = vadd.f32 %v1044, %v1151
    %v1153 = vpop.f32.mrb[0].mxu0
    %v1154 = vpop.f32.mrb[0].mxu0
    %v1155 = vadd.f32 %v1044, %v1154
    %v1156 = vpop.f32.mrb[0].mxu0
    %1157 = vmatprep.mubr.bf16.mxu0 0
    %1158 = vmatmul.mubr.bf16.gmra.mrb[0].mxu0 %v1037
    %v1159 = vpop.f32.mrb[0].mxu0
    %v1160 = vadd.f32 %v1044, %v1159
    %v1161 = vpop.f32.mrb[0].mxu0
    %v1162 = vpop.f32.mrb[0].mxu0
    %v1163 = vadd.f32 %v1044, %v1162
    %v1164 = vpop.f32.mrb[0].mxu0
    %1165 = vmatprep.mubr.bf16.mxu0 0
    %1166 = vmatmul.mubr.bf16.gmra.mrb[0].mxu0 %v1038
    %v1167 = vpop.f32.mrb[0].mxu0
    %v1168 = vadd.f32 %v1044, %v1167
    %v1169 = vpop.f32.mrb[0].mxu0
    %v1170 = vpop.f32.mrb[0].mxu0
    %v1171 = vadd.f32 %v1044, %v1170
    %v1172 = vpop.f32.mrb[0].mxu0
    %1173 = vmatprep.mubr.bf16.mxu0 0
    %1174 = vmatmul.mubr.bf16.gmra.mrb[0].mxu0 %v1039
    %v1175 = vpop.f32.mrb[0].mxu0
    %v1176 = vadd.f32 %v1044, %v1175
    %v1177 = vpop.f32.mrb[0].mxu0
    %v1178 = vpop.f32.mrb[0].mxu0
    %v1179 = vadd.f32 %v1044, %v1178
    %v1180 = vpop.f32.mrb[0].mxu0
    %1181 = vmatprep.mubr.bf16.mxu0 0
    %1182 = vmatmul.mubr.bf16.gmra.mrb[0].mxu0 %v1040
    %v1183 = vpop.f32.mrb[0].mxu0
    %v1184 = vadd.f32 %v1044, %v1183
    %v1185 = vpop.f32.mrb[0].mxu0
    %v1186 = vpop.f32.mrb[0].mxu0
    %v1187 = vadd.f32 %v1044, %v1186
    %v1188 = vpop.f32.mrb[0].mxu0
    %1189 = vdwg.mxu0
    %v1190 = vmax.f32 %v1128, 0.0
    %v1191 = vmax.f32 %v1131, 0.0
    %v1192 = vmax.f32 %v1136, 0.0
    %v1193 = vmax.f32 %v1139, 0.0
    %v1194 = vmax.f32 %v1144, 0.0
    %v1195 = vmax.f32 %v1147, 0.0
    %v1196 = vmax.f32 %v1152, 0.0
    %v1197 = vmax.f32 %v1155, 0.0
    %v1198 = vmax.f32 %v1160, 0.0
    %v1199 = vmax.f32 %v1163, 0.0
    %v1200 = vmax.f32 %v1168, 0.0
    %v1201 = vmax.f32 %v1171, 0.0
    %v1202 = vmax.f32 %v1176, 0.0
    %v1203 = vmax.f32 %v1179, 0.0
    %v1204 = vmax.f32 %v1184, 0.0
    %v1205 = vmax.f32 %v1187, 0.0
    %v1206 = vadd.f32 %v1190, %v1191
    %v1207 = vadd.f32 %v1206, %v1192
    %v1208 = vadd.f32 %v1207, %v1193
    %v1209 = vadd.f32 %v1208, %v1194
    %v1210 = vadd.f32 %v1209, %v1195
    %v1211 = vadd.f32 %v1210, %v1196
    %v1212 = vadd.f32 %v1211, %v1197
    %v1213 = vrot.slane %v1212, 4
    %v1214 = vadd.f32 %v1212, %v1213
    %v1215 = vrot.slane %v1214, 2
    %v1216 = vadd.f32 %v1214, %v1215
    %v1217 = vrot.slane %v1216, 1
    %v1218 = vadd.f32 %v1216, %v1217
    %v1219 = vadd.f32 %v1198, %v1199
    %v1220 = vadd.f32 %v1219, %v1200
    %v1221 = vadd.f32 %v1220, %v1201
    %v1222 = vadd.f32 %v1221, %v1202
    %v1223 = vadd.f32 %v1222, %v1203
    %v1224 = vadd.f32 %v1223, %v1204
    %v1225 = vadd.f32 %v1224, %v1205
    %v1226 = vrot.slane %v1225, 4
    %v1227 = vadd.f32 %v1225, %v1226
    %v1228 = vrot.slane %v1227, 2
    %v1229 = vadd.f32 %v1227, %v1228
    %v1230 = vrot.slane %v1229, 1
    %v1231 = vadd.f32 %v1229, %v1230
    %v1232 = vrcp.pop 64.0
    %v1233 = vmul.f32 %v1218, %v1232
    %v1234 = vmul.f32 %v1231, %v1232
    %v1237 = vsel %vm836, %v1234, %v1233
    %s1239 = scalar_lea.vmem [#allocation2], 2
    %1240 = vst [vmem:[%s1239] sm:$0x3] %v1237
    %v1241 = vld [vmem:[%s2] sm:$0xf]
    %v1242 = vld [vmem:[%s2 + $0x4] sm:$0xf]
    %v1243 = vld [vmem:[%s2 + $0x8] sm:$0xf]
    %v1244 = vld [vmem:[%s2 + $0xc] sm:$0xf]
    %v1249 = vunpack.c.l.b16 %v1241
    %v1250 = vunpack.c.l.b16 %v1242
    %v1251 = vunpack.c.l.b16 %v1243
    %v1252 = vunpack.c.l.b16 %v1244
    %v1253 = vpack.c.b16 %v1250, %v1249
    %v1254 = vpack.c.b16 %v1252, %v1251
    %v1256 = vsel %vm303, %v1253, 0
    %v1259 = vsel %vm303, %v1254, 0
    %1261 = vmatprep.subr.bf16.mxu0 0
    %1262 = vmatpush1.bf16.msra.mxu0 %v402
    %1263 = vmatprep.subr.bf16.mxu0 0
    %1264 = vmatpush1.bf16.msra.mxu0 0
    %1265 = vmatprep.subr.bf16.mxu0 0
    %1266 = vmatpush1.bf16.msra.mxu0 0
    %1267 = vmatprep.subr.bf16.mxu0 0
    %1268 = vmatpush1.bf16.msra.mxu0 0
    %1269 = vmatprep.subr.bf16.mxu0 0
    %1270 = vmatpush1.bf16.msra.mxu0 0
    %1271 = vmatprep.subr.bf16.mxu0 0
    %1272 = vmatpush1.bf16.msra.mxu0 0
    %1273 = vmatprep.subr.bf16.mxu0 0
    %1274 = vmatpush1.bf16.msra.mxu0 0
    %1275 = vmatprep.subr.bf16.mxu0 0
    %1276 = vmatpush1.bf16.msra.mxu0 0
    %1277 = vmatprep.subr.bf16.mxu0 0
    %1278 = vmatpush1.bf16.msra.mxu0 0
    %1279 = vmatprep.subr.bf16.mxu0 0
    %1280 = vmatpush1.bf16.msra.mxu0 0
    %1281 = vmatprep.subr.bf16.mxu0 0
    %1282 = vmatpush1.bf16.msra.mxu0 0
    %1283 = vmatprep.subr.bf16.mxu0 0
    %1284 = vmatpush1.bf16.msra.mxu0 0
    %1285 = vmatprep.subr.bf16.mxu0 0
    %1286 = vmatpush1.bf16.msra.mxu0 0
    %1287 = vmatprep.subr.bf16.mxu0 0
    %1288 = vmatpush1.bf16.msra.mxu0 0
    %1289 = vmatprep.subr.bf16.mxu0 0
    %1290 = vmatpush1.bf16.msra.mxu0 0
    %1291 = vmatprep.subr.bf16.mxu0 0
    %1292 = vmatpush1.bf16.msra.mxu0 0
    %1293 = vmatprep.mubr.bf16.mxu0 0
    %1294 = vmatmul.mubr.bf16.gmra.mrb[0].mxu0 %v1256
    %v1295 = vpop.f32.mrb[0].mxu0
    %v1296 = vadd.f32 %v142, %v1295
    %v1297 = vpop.f32.mrb[0].mxu0
    %v1298 = vpop.f32.mrb[0].mxu0
    %v1299 = vadd.f32 %v142, %v1298
    %v1300 = vpop.f32.mrb[0].mxu0
    %1301 = vmatprep.mubr.bf16.mxu0 0
    %1302 = vmatmul.mubr.bf16.gmra.mrb[0].mxu0 %v1259
    %v1303 = vpop.f32.mrb[0].mxu0
    %v1304 = vadd.f32 %v142, %v1303
    %v1305 = vpop.f32.mrb[0].mxu0
    %v1306 = vpop.f32.mrb[0].mxu0
    %v1307 = vadd.f32 %v142, %v1306
    %v1308 = vpop.f32.mrb[0].mxu0
    %1309 = vdwg.mxu0
    %v1310 = vmax.f32 %v1296, 0.0
    %v1311 = vmax.f32 %v1299, 0.0
    %v1312 = vmax.f32 %v1304, 0.0
    %v1313 = vmax.f32 %v1307, 0.0
    %v1314 = vpack.c.bf16 %v1311, %v1310
    %v1315 = vpack.c.bf16 %v1313, %v1312
    %1316 = vmatprep.subr.bf16.mxu0 0
    %1317 = vmatpush1.bf16.msra.mxu0 %v1077
    %1318 = vmatprep.subr.bf16.mxu0 0
    %1319 = vmatpush1.bf16.msra.mxu0 %v1078
    %1320 = vmatprep.subr.bf16.mxu0 0
    %1321 = vmatpush1.bf16.msra.mxu0 %v1079
    %1322 = vmatprep.subr.bf16.mxu0 0
    %1323 = vmatpush1.bf16.msra.mxu0 %v1080
    %1324 = vmatprep.subr.bf16.mxu0 0
    %1325 = vmatpush1.bf16.msra.mxu0 %v1081
    %1326 = vmatprep.subr.bf16.mxu0 0
    %1327 = vmatpush1.bf16.msra.mxu0 %v1082
    %1328 = vmatprep.subr.bf16.mxu0 0
    %1329 = vmatpush1.bf16.msra.mxu0 %v1083
    %1330 = vmatprep.subr.bf16.mxu0 0
    %1331 = vmatpush1.bf16.msra.mxu0 %v1084
    %1332 = vmatprep.subr.bf16.mxu0 0
    %1333 = vmatpush1.bf16.msra.mxu0 0
    %1334 = vmatprep.subr.bf16.mxu0 0
    %1335 = vmatpush1.bf16.msra.mxu0 0
    %1336 = vmatprep.subr.bf16.mxu0 0
    %1337 = vmatpush1.bf16.msra.mxu0 0
    %1338 = vmatprep.subr.bf16.mxu0 0
    %1339 = vmatpush1.bf16.msra.mxu0 0
    %1340 = vmatprep.subr.bf16.mxu0 0
    %1341 = vmatpush1.bf16.msra.mxu0 0
    %1342 = vmatprep.subr.bf16.mxu0 0
    %1343 = vmatpush1.bf16.msra.mxu0 0
    %1344 = vmatprep.subr.bf16.mxu0 0
    %1345 = vmatpush1.bf16.msra.mxu0 0
    %1346 = vmatprep.subr.bf16.mxu0 0
    %1347 = vmatpush1.bf16.msra.mxu0 0
    %1348 = vmatprep.mubr.bf16.mxu0 0
    %1349 = vmatmul.mubr.bf16.gmra.mrb[0].mxu0 %v1314
    %v1350 = vpop.f32.mrb[0].mxu0
    %v1351 = vadd.f32 %v1044, %v1350
    %v1352 = vpop.f32.mrb[0].mxu0
    %v1353 = vpop.f32.mrb[0].mxu0
    %v1354 = vadd.f32 %v1044, %v1353
    %v1355 = vpop.f32.mrb[0].mxu0
    %1356 = vmatprep.mubr.bf16.mxu0 0
    %1357 = vmatmul.mubr.bf16.gmra.mrb[0].mxu0 %v1315
    %v1358 = vpop.f32.mrb[0].mxu0
    %v1359 = vadd.f32 %v1044, %v1358
    %v1360 = vpop.f32.mrb[0].mxu0
    %v1361 = vpop.f32.mrb[0].mxu0
    %v1362 = vadd.f32 %v1044, %v1361
    %v1363 = vpop.f32.mrb[0].mxu0
    %1364 = vdwg.mxu0
    %v1365 = vmax.f32 %v1351, 0.0
    %v1366 = vmax.f32 %v1354, 0.0
    %v1367 = vmax.f32 %v1359, 0.0
    %v1368 = vmax.f32 %v1362, 0.0
    %v1369 = vpack.c.bf16 %v1366, %v1365
    %v1370 = vpack.c.bf16 %v1368, %v1367
    %v1371 = vlaneseq
    %v1372 = vshrl.u32 %v1371, 7
    %v1373 = vsub.s32 2, %v1372
    %v1374 = vrot.slane %v74, %v1373
    %v1391 = vunpack.c.l.b16 %v41
    %v1392 = vunpack.c.l.b16 %v42
    %v1393 = vunpack.c.l.b16 %v43
    %v1394 = vunpack.c.l.b16 %v44
    %v1395 = vunpack.c.l.b16 %v45
    %v1396 = vunpack.c.l.b16 %v46
    %v1397 = vunpack.c.l.b16 %v47
    %v1398 = vunpack.c.l.b16 %v48
    %v1399 = vunpack.c.l.b16 %v49
    %v1400 = vunpack.c.l.b16 %v50
    %v1401 = vunpack.c.l.b16 %v51
    %v1402 = vunpack.c.l.b16 %v52
    %v1403 = vunpack.c.l.b16 %v53
    %v1404 = vunpack.c.l.b16 %v54
    %v1405 = vunpack.c.l.b16 %v55
    %v1406 = vunpack.c.l.b16 %v56
    %v1407 = vpack.c.b16 %v1392, %v1391
    %v1408 = vpack.c.b16 %v1394, %v1393
    %v1409 = vpack.c.b16 %v1396, %v1395
    %v1410 = vpack.c.b16 %v1398, %v1397
    %v1411 = vpack.c.b16 %v1400, %v1399
    %v1412 = vpack.c.b16 %v1402, %v1401
    %v1413 = vpack.c.b16 %v1404, %v1403
    %v1414 = vpack.c.b16 %v1406, %v1405
    %1423 = vmatprep.subr.bf16.mxu0 0
    %1424 = vmatpush1.bf16.msra.mxu0 %v1407
    %1425 = vmatprep.subr.bf16.mxu0 0
    %1426 = vmatpush1.bf16.msra.mxu0 %v1408
    %1427 = vmatprep.subr.bf16.mxu0 0
    %1428 = vmatpush1.bf16.msra.mxu0 %v1409
    %1429 = vmatprep.subr.bf16.mxu0 0
    %1430 = vmatpush1.bf16.msra.mxu0 %v1410
    %1431 = vmatprep.subr.bf16.mxu0 0
    %1432 = vmatpush1.bf16.msra.mxu0 %v1411
    %1433 = vmatprep.subr.bf16.mxu0 0
    %1434 = vmatpush1.bf16.msra.mxu0 %v1412
    %1435 = vmatprep.subr.bf16.mxu0 0
    %1436 = vmatpush1.bf16.msra.mxu0 %v1413
    %1437 = vmatprep.subr.bf16.mxu0 0
    %1438 = vmatpush1.bf16.msra.mxu0 %v1414
    %1439 = vmatprep.subr.bf16.mxu0 0
    %1440 = vmatpush1.bf16.msra.mxu0 0
    %1441 = vmatprep.subr.bf16.mxu0 0
    %1442 = vmatpush1.bf16.msra.mxu0 0
    %1443 = vmatprep.subr.bf16.mxu0 0
    %1444 = vmatpush1.bf16.msra.mxu0 0
    %1445 = vmatprep.subr.bf16.mxu0 0
    %1446 = vmatpush1.bf16.msra.mxu0 0
    %1447 = vmatprep.subr.bf16.mxu0 0
    %1448 = vmatpush1.bf16.msra.mxu0 0
    %1449 = vmatprep.subr.bf16.mxu0 0
    %1450 = vmatpush1.bf16.msra.mxu0 0
    %1451 = vmatprep.subr.bf16.mxu0 0
    %1452 = vmatpush1.bf16.msra.mxu0 0
    %1453 = vmatprep.subr.bf16.mxu0 0
    %1454 = vmatpush1.bf16.msra.mxu0 0
    %1455 = vmatprep.mubr.bf16.mxu0 0
    %1456 = vmatmul.mubr.bf16.gmra.mrb[0].mxu0 %v1369
    %v1457 = vpop.f32.mrb[0].mxu0
    %v1458 = vadd.f32 %v1374, %v1457
    %v1459 = vpop.f32.mrb[0].mxu0
    %v1460 = vpop.f32.mrb[0].mxu0
    %v1461 = vadd.f32 %v1374, %v1460
    %v1462 = vpop.f32.mrb[0].mxu0
    %1463 = vmatprep.mubr.bf16.mxu0 0
    %1464 = vmatmul.mubr.bf16.gmra.mrb[0].mxu0 %v1370
    %v1465 = vpop.f32.mrb[0].mxu0
    %v1466 = vadd.f32 %v1374, %v1465
    %v1467 = vpop.f32.mrb[0].mxu0
    %v1468 = vpop.f32.mrb[0].mxu0
    %v1469 = vadd.f32 %v1374, %v1468
    %v1470 = vpop.f32.mrb[0].mxu0
    %1471 = vdwg.mxu0
    %v1472 = vmax.f32 %v1458, 0.0
    %v1473 = vmax.f32 %v1461, 0.0
    %v1474 = vmax.f32 %v1466, 0.0
    %v1475 = vmax.f32 %v1469, 0.0
    %v1476 = vadd.f32 %v1472, %v1473
    %v1477 = vrot.slane %v1476, 4
    %v1478 = vadd.f32 %v1476, %v1477
    %v1479 = vrot.slane %v1478, 2
    %v1480 = vadd.f32 %v1478, %v1479
    %v1481 = vrot.slane %v1480, 1
    %v1482 = vadd.f32 %v1480, %v1481
    %v1483 = vadd.f32 %v1474, %v1475
    %v1484 = vrot.slane %v1483, 4
    %v1485 = vadd.f32 %v1483, %v1484
    %v1486 = vrot.slane %v1485, 2
    %v1487 = vadd.f32 %v1485, %v1486
    %v1488 = vrot.slane %v1487, 1
    %v1489 = vadd.f32 %v1487, %v1488
    %v1490 = vrcp.pop 16.0
    %v1491 = vmul.f32 %v1482, %v1490
    %v1492 = vmul.f32 %v1489, %v1490
    %v1495 = vsel %vm836, %v1492, %v1491
    %s1497 = scalar_lea.vmem [#allocation2], 4
    %1498 = vst [vmem:[%s1497] sm:$0x3] %v1495
    %v1499 = vpack.c.bf16 %v1491, %v1491
    %v1500 = vpack.c.bf16 %v1492, %v1492
    %v1501 = vlaneseq
    %v1502 = vshrl.u32 %v1501, 7
    %v1503 = vsub.s32 3, %v1502
    %v1504 = vrot.slane %v74, %v1503
    %v1507 = vunpack.c.l.b16 %v1499
    %v1508 = vunpack.c.l.b16 %v1500
    %v1509 = vsel %vm836, %v1508, %v1507
    %v1510 = vpack.c.b16 %v1509, %v1509
    %v1528 = vunpack.c.l.b16 %v58
    %v1529 = vunpack.c.l.b16 %v59
    %v1530 = vunpack.c.l.b16 %v60
    %v1531 = vunpack.c.l.b16 %v61
    %v1532 = vunpack.c.l.b16 %v62
    %v1533 = vunpack.c.l.b16 %v63
    %v1534 = vunpack.c.l.b16 %v64
    %v1535 = vunpack.c.l.b16 %v65
    %v1536 = vunpack.c.l.b16 %v66
    %v1537 = vunpack.c.l.b16 %v67
    %v1538 = vunpack.c.l.b16 %v68
    %v1539 = vunpack.c.l.b16 %v69
    %v1540 = vunpack.c.l.b16 %v70
    %v1541 = vunpack.c.l.b16 %v71
    %v1542 = vunpack.c.l.b16 %v72
    %v1543 = vunpack.c.l.b16 %v73
    %v1544 = vpack.c.b16 %v1529, %v1528
    %v1545 = vpack.c.b16 %v1531, %v1530
    %v1546 = vpack.c.b16 %v1533, %v1532
    %v1547 = vpack.c.b16 %v1535, %v1534
    %v1548 = vpack.c.b16 %v1537, %v1536
    %v1549 = vpack.c.b16 %v1539, %v1538
    %v1550 = vpack.c.b16 %v1541, %v1540
    %v1551 = vpack.c.b16 %v1543, %v1542
    %1560 = vmatprep.subr.bf16.mxu0 0
    %1561 = vmatpush1.bf16.msra.mxu0 %v1544
    %1562 = vmatprep.subr.bf16.mxu0 0
    %1563 = vmatpush1.bf16.msra.mxu0 %v1545
    %1564 = vmatprep.subr.bf16.mxu0 0
    %1565 = vmatpush1.bf16.msra.mxu0 %v1546
    %1566 = vmatprep.subr.bf16.mxu0 0
    %1567 = vmatpush1.bf16.msra.mxu0 %v1547
    %1568 = vmatprep.subr.bf16.mxu0 0
    %1569 = vmatpush1.bf16.msra.mxu0 %v1548
    %1570 = vmatprep.subr.bf16.mxu0 0
    %1571 = vmatpush1.bf16.msra.mxu0 %v1549
    %1572 = vmatprep.subr.bf16.mxu0 0
    %1573 = vmatpush1.bf16.msra.mxu0 %v1550
    %1574 = vmatprep.subr.bf16.mxu0 0
    %1575 = vmatpush1.bf16.msra.mxu0 %v1551
    %1576 = vmatprep.subr.bf16.mxu0 0
    %1577 = vmatpush1.bf16.msra.mxu0 0
    %1578 = vmatprep.subr.bf16.mxu0 0
    %1579 = vmatpush1.bf16.msra.mxu0 0
    %1580 = vmatprep.subr.bf16.mxu0 0
    %1581 = vmatpush1.bf16.msra.mxu0 0
    %1582 = vmatprep.subr.bf16.mxu0 0
    %1583 = vmatpush1.bf16.msra.mxu0 0
    %1584 = vmatprep.subr.bf16.mxu0 0
    %1585 = vmatpush1.bf16.msra.mxu0 0
    %1586 = vmatprep.subr.bf16.mxu0 0
    %1587 = vmatpush1.bf16.msra.mxu0 0
    %1588 = vmatprep.subr.bf16.mxu0 0
    %1589 = vmatpush1.bf16.msra.mxu0 0
    %1590 = vmatprep.subr.bf16.mxu0 0
    %1591 = vmatpush1.bf16.msra.mxu0 0
    %1592 = vmatprep.mubr.bf16.mxu0 0
    %1593 = vmatmul.mubr.bf16.gmra.mrb[0].mxu0 %v1510
    %v1594 = vpop.f32.mrb[0].mxu0
    %v1595 = vadd.f32 %v1504, %v1594
    %v1596 = vpop.f32.mrb[0].mxu0
    %v1597 = vpop.f32.mrb[0].mxu0
    %v1598 = vpop.f32.mrb[0].mxu0
    %1599 = vdwg.mxu0
    %s1600 = scalar_lea.vmem [#allocation2], 6
    %1601 = vst [vmem:[%s1600] sm:$0x3] %v1595
    // Predicated region
    $region22: #{tpu_custom_call.1} parent=1 // pred_check
      _
    $region23: #{tpu_custom_call.1} parent=1 // pred_check_branch
      %1603 = sbr.rel (0) target = $region25
    $region24: #{tpu_custom_call.1} parent=1 // pred_region
      %s1605 = ssub.s32 128, 128
      %1606 = vsyncadd [#allocation3], %s1605
      %s1607 = sshll.u32 [#allocation2], 4
      %s1608 = int_to_ptr.vmem [resolvable:$true] %s1607
      %1613 = dma.vmem_to_hbm [thread:$0]  %s1608, 128, %s5, [#allocation3], 32, 32, 2
    $region25: #{tpu_custom_call.1} parent=1 // pred_fallthru
      _
    // Predicated region
    $region26: #{tpu_custom_call.1} parent=1 // pred_check
      _
    $region27: #{tpu_custom_call.1} parent=1 // pred_check_branch
      %1615 = sbr.rel (0) target = $region29
    $region28: #{tpu_custom_call.1} parent=1 // pred_region
      %1616 = dma.done [#allocation3], 128
    $region29: #{tpu_custom_call.1} parent=1 // pred_fallthru
      _
    %1617 = vsyncpa [#allocation3], 1

</llo_original>
